<compile_context>
chip_gen: v7x
topology: tpu7x:2x2x1
jax: 0.10.0
libtpu: 0.0.40
codegen_flags: <defaults>
</compile_context>

<pallas_src>
import numpy as np
import jax
import jax.numpy as jnp
from jax.experimental import pallas as pl
from jax.experimental.pallas import tpu as pltpu

LANE = 128


def _round_up(v, m):
    return ((v + m - 1) // m) * m


# ---------------------------------------------------------------------------
# Fused Pallas kernel
# ---------------------------------------------------------------------------
def _make_skipmpn_kernel(K, n_conv):
    def kernel(*refs):
        (a_ref, s_ref, gi_ref, gj_ref, x_ref, e_ref,
         w1i_ref, w1j_ref, w1e_ref, b1_ref, w2_ref, b2_ref) = refs[:12]
        conv_refs = refs[12:12 + 2 * n_conv]
        out_ref = refs[-1]

        f32, bf16 = jnp.float32, jnp.bfloat16

        x_in = x_ref[...]                       # (Np, 128) f32, dim_featn real columns
        x_bf = x_in.astype(bf16)

        # ---- EdgeAggregation: per-edge MLP on cat([x_i, x_j, e]) + scatter-add ----
        # x_i = x[col], x_j = x[row] as one-hot gather matmuls (MXU)
        xi = jnp.dot(gi_ref[...], x_bf, preferred_element_type=f32)    # (Ep, 128)
        xj = jnp.dot(gj_ref[...], x_bf, preferred_element_type=f32)
        # first Linear: W1 split row-wise into [x_i | x_j | e] blocks, each padded
        # to a 128-wide contraction (concat-free formulation)
        h = (jnp.dot(xi.astype(bf16), w1i_ref[...], preferred_element_type=f32)
             + jnp.dot(xj.astype(bf16), w1j_ref[...], preferred_element_type=f32)
             + jnp.dot(e_ref[...].astype(bf16), w1e_ref[...], preferred_element_type=f32)
             + b1_ref[...])
        h = jnp.maximum(h, 0.0)                                         # ReLU (f32)
        m = jnp.dot(h.astype(bf16), w2_ref[...], preferred_element_type=f32) + b2_ref[...]
        # aggr='add': out[n] = sum_{e: col[e]==n} m[e]
        x = jnp.dot(s_ref[...], m.astype(bf16), preferred_element_type=f32)   # (Np, H)

        a = a_ref[...]                          # (Np, Np) bf16, D^-1/2 A D^-1/2

        # ---- TAGConv stack -----------------------------------------------------
        for i in range(n_conv):
            w_ref = conv_refs[2 * i]            # ((K+1)*H, Cout) bf16 (last layer Cout = 128)
            b_ref = conv_refs[2 * i + 1]        # (1, Cout) f32
            hops = [x]
            xk = x
            for _ in range(K):
                xk = jnp.dot(a, xk.astype(bf16), preferred_element_type=f32)
                hops.append(xk)
            hop_stack = jnp.concatenate(hops, axis=-1)   # (Np, (K+1)*H) = (Np, 128)
            x = jnp.dot(hop_stack.astype(bf16), w_ref[...],
                        preferred_element_type=f32) + b_ref[...]
            if i != n_conv - 1:
                # TODO(synk): nn.Dropout(dropout_rate) between convs -- inference identity.
                x = jnp.maximum(x, 0.0)

        # ---- skip connection: x = input_x + x (dim_out == dim_featn, low lanes) ----
        out_ref[...] = x + x_in                 # (Np, 128) lane-dense store

    return kernel


def skipmpn_call(A, S, Gi, Gj, x_pad, e_pad, w1i, w1j, w1e, b1, w2, b2,
                 conv_w, conv_b, K):
    n_conv = len(conv_w)
    inputs = [A, S, Gi, Gj, x_pad, e_pad, w1i, w1j, w1e, b1, w2, b2]
    for w, b in zip(conv_w, conv_b):
        inputs += [w, b]
    Np = x_pad.shape[0]
    return pl.pallas_call(
        _make_skipmpn_kernel(K, n_conv),
        out_shape=jax.ShapeDtypeStruct((Np, LANE), jnp.float32),
        in_specs=[pl.BlockSpec(memory_space=pltpu.MemorySpace.VMEM)] * len(inputs),
        out_specs=pl.BlockSpec(memory_space=pltpu.MemorySpace.VMEM),
    )(*inputs)


# ---------------------------------------------------------------------------
# Graph glue (data prep, plain numpy) -- faithful to the PyTorch module
# ---------------------------------------------------------------------------
def is_directed(edge_index):
    mask = edge_index[0, :] == edge_index[1, 0]
    return edge_index[0, 0] not in edge_index[1, mask]


def undirect_graph(edge_index, edge_attr):
    edge_index = np.asarray(edge_index)
    edge_attr = np.asarray(edge_attr, np.float32)
    if is_directed(edge_index):
        ei_dup = np.stack([edge_index[1, :], edge_index[0, :]], axis=0)
        edge_index = np.concatenate([edge_index, ei_dup], axis=1)
        ea_dup = np.concatenate(
            [-edge_attr[:, 0:1], edge_attr[:, 1:2], -edge_attr[:, 2:3], edge_attr[:, 3:]],
            axis=1)
        edge_attr = np.concatenate([edge_attr, ea_dup], axis=0)
    return edge_index, edge_attr


def build_graph_mats(edge_index, num_nodes, n_pad, e_pad):
    """A_norm = D^-1/2 A D^-1/2 (gcn_norm, no self loops, matching TAGConv),
    scatter matrix S (col-indexed add) and one-hot gather matrices Gi (col), Gj (row)."""
    row, col = edge_index[0], edge_index[1]
    E = row.shape[0]
    deg = np.zeros(num_nodes, np.float32)
    np.add.at(deg, col, 1.0)
    dinv = np.zeros(num_nodes, np.float32)
    nz = deg > 0
    dinv[nz] = deg[nz] ** -0.5
    norm = dinv[row] * dinv[col]
    A = np.zeros((n_pad, n_pad), np.float32)
    np.add.at(A, (col, row), norm)
    S = np.zeros((n_pad, e_pad), np.float32)
    S[col, np.arange(E)] = 1.0
    Gi = np.zeros((e_pad, n_pad), np.float32)
    Gi[np.arange(E), col] = 1.0
    Gj = np.zeros((e_pad, n_pad), np.float32)
    Gj[np.arange(E), row] = 1.0
    return A, S, Gi, Gj


# ---------------------------------------------------------------------------
# Parameters (deterministic synthetic init)
# ---------------------------------------------------------------------------
def _init_linear(key, fan_in, fan_out):
    kw, kb = jax.random.split(key)
    bound = 1.0 / np.sqrt(fan_in)
    W = jax.random.uniform(kw, (fan_in, fan_out), jnp.float32, -bound, bound)
    b = jax.random.uniform(kb, (1, fan_out), jnp.float32, -bound, bound)
    return np.asarray(W), np.asarray(b)


def init_skipmpn_params(key, dim_featn, dim_feate, dim_out, dim_hid, n_gnn_layers, K):
    key, k1, k2 = jax.random.split(key, 3)
    ea_W1, ea_b1 = _init_linear(k1, 2 * dim_featn + dim_feate, dim_hid)
    ea_W2, ea_b2 = _init_linear(k2, dim_hid, dim_hid)
    convs = []
    for i in range(n_gnn_layers):
        cout = dim_out if i == n_gnn_layers - 1 else dim_hid
        key, kw, kb = jax.random.split(key, 3)
        bound = 1.0 / np.sqrt(dim_hid)
        W = np.asarray(jax.random.uniform(kw, (K + 1, dim_hid, cout), jnp.float32, -bound, bound))
        b = np.asarray(jax.random.uniform(kb, (1, cout), jnp.float32, -bound, bound))
        convs.append((W, b))
    return dict(ea_W1=ea_W1, ea_b1=ea_b1, ea_W2=ea_W2, ea_b2=ea_b2, convs=convs)


# ---------------------------------------------------------------------------
# Forward pass (one fused kernel launch)
# ---------------------------------------------------------------------------
def skipmpn_forward(x, edge_index, edge_attr, params, K):
    x = np.asarray(x, np.float32)
    N, F = x.shape
    edge_index_u, edge_attr_u = undirect_graph(edge_index, edge_attr)
    E = edge_index_u.shape[1]
    Fe = edge_attr_u.shape[1]
    H = params["ea_W2"].shape[1]
    Np = _round_up(max(N, 8), 8)
    Ep = _round_up(max(E, 8), 8)

    A, S, Gi, Gj = build_graph_mats(edge_index_u, N, Np, Ep)

    # pad node / edge features to 128 lanes (contraction and store alignment)
    x_pad = np.zeros((Np, LANE), np.float32)
    x_pad[:N, :F] = x
    e_pad = np.zeros((Ep, LANE), np.float32)
    e_pad[:E, :Fe] = edge_attr_u

    # split edge-MLP W1 by the [x_i | x_j | e] input blocks, pad contraction to 128
    W1 = params["ea_W1"]
    w1i = np.zeros((LANE, H), np.float32); w1i[:F] = W1[:F]
    w1j = np.zeros((LANE, H), np.float32); w1j[:F] = W1[F:2 * F]
    w1e = np.zeros((LANE, H), np.float32); w1e[:Fe] = W1[2 * F:]

    # TAGConv weights: stack the K+1 hop matrices along the contraction axis;
    # last layer's Cout is padded to 128 lanes for a lane-dense output store.
    conv_w, conv_b = [], []
    n_conv = len(params["convs"])
    for i, (W, b) in enumerate(params["convs"]):
        cout = W.shape[-1]
        Wstk = W.reshape((K + 1) * H, cout)
        if i == n_conv - 1:
            Wp = np.zeros(((K + 1) * H, LANE), np.float32); Wp[:, :cout] = Wstk
            bp = np.zeros((1, LANE), np.float32); bp[:, :cout] = b
        else:
            Wp, bp = Wstk, b
        conv_w.append(jnp.asarray(Wp, jnp.bfloat16))
        conv_b.append(jnp.asarray(bp, jnp.float32))

    out = skipmpn_call(
        jnp.asarray(A, jnp.bfloat16), jnp.asarray(S, jnp.bfloat16),
        jnp.asarray(Gi, jnp.bfloat16), jnp.asarray(Gj, jnp.bfloat16),
        jnp.asarray(x_pad, jnp.float32), jnp.asarray(e_pad, jnp.float32),
        jnp.asarray(w1i, jnp.bfloat16), jnp.asarray(w1j, jnp.bfloat16),
        jnp.asarray(w1e, jnp.bfloat16),
        jnp.asarray(params["ea_b1"], jnp.float32),
        jnp.asarray(params["ea_W2"], jnp.bfloat16),
        jnp.asarray(params["ea_b2"], jnp.float32),
        conv_w, conv_b, K)

    dim_out = params["convs"][-1][0].shape[-1]
    return out[:N, :dim_out]


# ---------------------------------------------------------------------------
if __name__ == "__main__":
    # small config consistent with the module (skip connection => dim_out == dim_featn)
    dim_featn, dim_feate = 4, 4
    dim_out, dim_hid = 4, 32
    n_gnn_layers, K, dropout_rate = 2, 3, 0.5
    num_nodes, num_edges = 16, 24

    key = jax.random.PRNGKey(0)
    key, kx, ke, kc, kp = jax.random.split(key, 5)

    x = jax.random.normal(kx, (num_nodes, dim_featn), jnp.float32)
    edge_attr = jax.random.normal(ke, (num_edges, dim_feate), jnp.float32)

    # directed edge_index (i < j, no duplicates) -> undirect_graph path is exercised
    all_pairs = np.array(
        [(i, j) for i in range(num_nodes) for j in range(i + 1, num_nodes)], dtype=np.int32)
    sel = np.asarray(jax.random.choice(kc, all_pairs.shape[0], (num_edges,), replace=False))
    pairs = all_pairs[sel]
    edge_index = np.stack([pairs[:, 0], pairs[:, 1]], axis=0).astype(np.int32)

    params = init_skipmpn_params(kp, dim_featn, dim_feate, dim_out, dim_hid, n_gnn_layers, K)

    out = skipmpn_forward(np.asarray(x), edge_index, np.asarray(edge_attr), params, K)
    out = jax.block_until_ready(out)
    assert out.shape == (num_nodes, dim_out)
    print("KERNEL_OK")
</pallas_src>

<mosaic_0001>
module attributes {stable_mosaic.version = 11 : i64} {
  func.func @kernel(%arg0: memref<16x16xbf16, #tpu.memory_space<vmem>>, %arg1: memref<16x48xbf16, #tpu.memory_space<vmem>>, %arg2: memref<48x16xbf16, #tpu.memory_space<vmem>>, %arg3: memref<48x16xbf16, #tpu.memory_space<vmem>>, %arg4: memref<16x128xf32, #tpu.memory_space<vmem>>, %arg5: memref<48x128xf32, #tpu.memory_space<vmem>>, %arg6: memref<128x32xbf16, #tpu.memory_space<vmem>>, %arg7: memref<128x32xbf16, #tpu.memory_space<vmem>>, %arg8: memref<128x32xbf16, #tpu.memory_space<vmem>>, %arg9: memref<1x32xf32, #tpu.memory_space<vmem>>, %arg10: memref<32x32xbf16, #tpu.memory_space<vmem>>, %arg11: memref<1x32xf32, #tpu.memory_space<vmem>>, %arg12: memref<128x32xbf16, #tpu.memory_space<vmem>>, %arg13: memref<1x32xf32, #tpu.memory_space<vmem>>, %arg14: memref<128x128xbf16, #tpu.memory_space<vmem>>, %arg15: memref<1x128xf32, #tpu.memory_space<vmem>>, %arg16: memref<16x128xf32, #tpu.memory_space<vmem>>) attributes {dimension_semantics = [], scalar_prefetch = 0 : i64, scratch_operands = 0 : i64, tpu.core_type = #tpu.core_type<tc>} {
    %c0 = arith.constant 0 : index
    %c0_0 = arith.constant 0 : index
    %0 = vector.load %arg4[%c0, %c0_0] : memref<16x128xf32, #tpu.memory_space<vmem>>, vector<16x128xf32>
    %1 = arith.truncf %0 : vector<16x128xf32> to vector<16x128xbf16>
    %c0_1 = arith.constant 0 : index
    %c0_2 = arith.constant 0 : index
    %2 = vector.load %arg2[%c0_1, %c0_2] : memref<48x16xbf16, #tpu.memory_space<vmem>>, vector<48x16xbf16>
    %cst = arith.constant dense<0.000000e+00> : vector<48x128xf32>
    %3 = tpu.matmul %2, %1, %cst {dimension_numbers = #tpu.dot_dimension_numbers<[1], [0], [0], [1], [0, 0, 1, 1], [], []>} : vector<48x16xbf16>, vector<16x128xbf16>, vector<48x128xf32> -> vector<48x128xf32>
    %c0_3 = arith.constant 0 : index
    %c0_4 = arith.constant 0 : index
    %4 = vector.load %arg3[%c0_3, %c0_4] : memref<48x16xbf16, #tpu.memory_space<vmem>>, vector<48x16xbf16>
    %cst_5 = arith.constant dense<0.000000e+00> : vector<48x128xf32>
    %5 = tpu.matmul %4, %1, %cst_5 {dimension_numbers = #tpu.dot_dimension_numbers<[1], [0], [0], [1], [0, 0, 1, 1], [], []>} : vector<48x16xbf16>, vector<16x128xbf16>, vector<48x128xf32> -> vector<48x128xf32>
    %6 = arith.truncf %3 : vector<48x128xf32> to vector<48x128xbf16>
    %c0_6 = arith.constant 0 : index
    %c0_7 = arith.constant 0 : index
    %7 = vector.load %arg6[%c0_6, %c0_7] : memref<128x32xbf16, #tpu.memory_space<vmem>>, vector<128x32xbf16>
    %cst_8 = arith.constant dense<0.000000e+00> : vector<48x32xf32>
    %8 = tpu.matmul %6, %7, %cst_8 {dimension_numbers = #tpu.dot_dimension_numbers<[1], [0], [0], [1], [0, 0, 1, 1], [], []>} : vector<48x128xbf16>, vector<128x32xbf16>, vector<48x32xf32> -> vector<48x32xf32>
    %9 = arith.truncf %5 : vector<48x128xf32> to vector<48x128xbf16>
    %c0_9 = arith.constant 0 : index
    %c0_10 = arith.constant 0 : index
    %10 = vector.load %arg7[%c0_9, %c0_10] : memref<128x32xbf16, #tpu.memory_space<vmem>>, vector<128x32xbf16>
    %cst_11 = arith.constant dense<0.000000e+00> : vector<48x32xf32>
    %11 = tpu.matmul %9, %10, %cst_11 {dimension_numbers = #tpu.dot_dimension_numbers<[1], [0], [0], [1], [0, 0, 1, 1], [], []>} : vector<48x128xbf16>, vector<128x32xbf16>, vector<48x32xf32> -> vector<48x32xf32>
    %12 = arith.addf %8, %11 : vector<48x32xf32>
    %c0_12 = arith.constant 0 : index
    %c0_13 = arith.constant 0 : index
    %13 = vector.load %arg5[%c0_12, %c0_13] : memref<48x128xf32, #tpu.memory_space<vmem>>, vector<48x128xf32>
    %14 = arith.truncf %13 : vector<48x128xf32> to vector<48x128xbf16>
    %c0_14 = arith.constant 0 : index
    %c0_15 = arith.constant 0 : index
    %15 = vector.load %arg8[%c0_14, %c0_15] : memref<128x32xbf16, #tpu.memory_space<vmem>>, vector<128x32xbf16>
    %cst_16 = arith.constant dense<0.000000e+00> : vector<48x32xf32>
    %16 = tpu.matmul %14, %15, %cst_16 {dimension_numbers = #tpu.dot_dimension_numbers<[1], [0], [0], [1], [0, 0, 1, 1], [], []>} : vector<48x128xbf16>, vector<128x32xbf16>, vector<48x32xf32> -> vector<48x32xf32>
    %17 = arith.addf %12, %16 : vector<48x32xf32>
    %c0_17 = arith.constant 0 : index
    %c0_18 = arith.constant 0 : index
    %18 = vector.load %arg9[%c0_17, %c0_18] : memref<1x32xf32, #tpu.memory_space<vmem>>, vector<1x32xf32>
    %19 = vector.broadcast %18 : vector<1x32xf32> to vector<48x32xf32>
    %20 = arith.addf %17, %19 : vector<48x32xf32>
    %cst_19 = arith.constant 0.000000e+00 : f32
    %21 = vector.broadcast %cst_19 : f32 to vector<48x32xf32>
    %22 = arith.maximumf %20, %21 : vector<48x32xf32>
    %23 = arith.truncf %22 : vector<48x32xf32> to vector<48x32xbf16>
    %c0_20 = arith.constant 0 : index
    %c0_21 = arith.constant 0 : index
    %24 = vector.load %arg10[%c0_20, %c0_21] : memref<32x32xbf16, #tpu.memory_space<vmem>>, vector<32x32xbf16>
    %cst_22 = arith.constant dense<0.000000e+00> : vector<48x32xf32>
    %25 = tpu.matmul %23, %24, %cst_22 {dimension_numbers = #tpu.dot_dimension_numbers<[1], [0], [0], [1], [0, 0, 1, 1], [], []>} : vector<48x32xbf16>, vector<32x32xbf16>, vector<48x32xf32> -> vector<48x32xf32>
    %c0_23 = arith.constant 0 : index
    %c0_24 = arith.constant 0 : index
    %26 = vector.load %arg11[%c0_23, %c0_24] : memref<1x32xf32, #tpu.memory_space<vmem>>, vector<1x32xf32>
    %27 = vector.broadcast %26 : vector<1x32xf32> to vector<48x32xf32>
    %28 = arith.addf %25, %27 : vector<48x32xf32>
    %c0_25 = arith.constant 0 : index
    %c0_26 = arith.constant 0 : index
    %29 = vector.load %arg1[%c0_25, %c0_26] : memref<16x48xbf16, #tpu.memory_space<vmem>>, vector<16x48xbf16>
    %30 = arith.truncf %28 : vector<48x32xf32> to vector<48x32xbf16>
    %cst_27 = arith.constant dense<0.000000e+00> : vector<16x32xf32>
    %31 = tpu.matmul %29, %30, %cst_27 {dimension_numbers = #tpu.dot_dimension_numbers<[1], [0], [0], [1], [0, 0, 1, 1], [], []>} : vector<16x48xbf16>, vector<48x32xbf16>, vector<16x32xf32> -> vector<16x32xf32>
    %c0_28 = arith.constant 0 : index
    %c0_29 = arith.constant 0 : index
    %32 = vector.load %arg0[%c0_28, %c0_29] : memref<16x16xbf16, #tpu.memory_space<vmem>>, vector<16x16xbf16>
    %33 = arith.truncf %31 : vector<16x32xf32> to vector<16x32xbf16>
    %cst_30 = arith.constant dense<0.000000e+00> : vector<16x32xf32>
    %34 = tpu.matmul %32, %33, %cst_30 {dimension_numbers = #tpu.dot_dimension_numbers<[1], [0], [0], [1], [0, 0, 1, 1], [], []>} : vector<16x16xbf16>, vector<16x32xbf16>, vector<16x32xf32> -> vector<16x32xf32>
    %35 = arith.truncf %34 : vector<16x32xf32> to vector<16x32xbf16>
    %cst_31 = arith.constant dense<0.000000e+00> : vector<16x32xf32>
    %36 = tpu.matmul %32, %35, %cst_31 {dimension_numbers = #tpu.dot_dimension_numbers<[1], [0], [0], [1], [0, 0, 1, 1], [], []>} : vector<16x16xbf16>, vector<16x32xbf16>, vector<16x32xf32> -> vector<16x32xf32>
    %37 = arith.truncf %36 : vector<16x32xf32> to vector<16x32xbf16>
    %cst_32 = arith.constant dense<0.000000e+00> : vector<16x32xf32>
    %38 = tpu.matmul %32, %37, %cst_32 {dimension_numbers = #tpu.dot_dimension_numbers<[1], [0], [0], [1], [0, 0, 1, 1], [], []>} : vector<16x16xbf16>, vector<16x32xbf16>, vector<16x32xf32> -> vector<16x32xf32>
    %39 = tpu.concatenate %31, %34, %36, %38 in 1 : vector<16x32xf32>, vector<16x32xf32>, vector<16x32xf32>, vector<16x32xf32> -> vector<16x128xf32>
    %40 = arith.truncf %39 : vector<16x128xf32> to vector<16x128xbf16>
    %c0_33 = arith.constant 0 : index
    %c0_34 = arith.constant 0 : index
    %41 = vector.load %arg12[%c0_33, %c0_34] : memref<128x32xbf16, #tpu.memory_space<vmem>>, vector<128x32xbf16>
    %cst_35 = arith.constant dense<0.000000e+00> : vector<16x32xf32>
    %42 = tpu.matmul %40, %41, %cst_35 {dimension_numbers = #tpu.dot_dimension_numbers<[1], [0], [0], [1], [0, 0, 1, 1], [], []>} : vector<16x128xbf16>, vector<128x32xbf16>, vector<16x32xf32> -> vector<16x32xf32>
    %c0_36 = arith.constant 0 : index
    %c0_37 = arith.constant 0 : index
    %43 = vector.load %arg13[%c0_36, %c0_37] : memref<1x32xf32, #tpu.memory_space<vmem>>, vector<1x32xf32>
    %44 = vector.broadcast %43 : vector<1x32xf32> to vector<16x32xf32>
    %45 = arith.addf %42, %44 : vector<16x32xf32>
    %cst_38 = arith.constant 0.000000e+00 : f32
    %46 = vector.broadcast %cst_38 : f32 to vector<16x32xf32>
    %47 = arith.maximumf %45, %46 : vector<16x32xf32>
    %48 = arith.truncf %47 : vector<16x32xf32> to vector<16x32xbf16>
    %cst_39 = arith.constant dense<0.000000e+00> : vector<16x32xf32>
    %49 = tpu.matmul %32, %48, %cst_39 {dimension_numbers = #tpu.dot_dimension_numbers<[1], [0], [0], [1], [0, 0, 1, 1], [], []>} : vector<16x16xbf16>, vector<16x32xbf16>, vector<16x32xf32> -> vector<16x32xf32>
    %50 = arith.truncf %49 : vector<16x32xf32> to vector<16x32xbf16>
    %cst_40 = arith.constant dense<0.000000e+00> : vector<16x32xf32>
    %51 = tpu.matmul %32, %50, %cst_40 {dimension_numbers = #tpu.dot_dimension_numbers<[1], [0], [0], [1], [0, 0, 1, 1], [], []>} : vector<16x16xbf16>, vector<16x32xbf16>, vector<16x32xf32> -> vector<16x32xf32>
    %52 = arith.truncf %51 : vector<16x32xf32> to vector<16x32xbf16>
    %cst_41 = arith.constant dense<0.000000e+00> : vector<16x32xf32>
    %53 = tpu.matmul %32, %52, %cst_41 {dimension_numbers = #tpu.dot_dimension_numbers<[1], [0], [0], [1], [0, 0, 1, 1], [], []>} : vector<16x16xbf16>, vector<16x32xbf16>, vector<16x32xf32> -> vector<16x32xf32>
    %54 = tpu.concatenate %47, %49, %51, %53 in 1 : vector<16x32xf32>, vector<16x32xf32>, vector<16x32xf32>, vector<16x32xf32> -> vector<16x128xf32>
    %55 = arith.truncf %54 : vector<16x128xf32> to vector<16x128xbf16>
    %c0_42 = arith.constant 0 : index
    %c0_43 = arith.constant 0 : index
    %56 = vector.load %arg14[%c0_42, %c0_43] : memref<128x128xbf16, #tpu.memory_space<vmem>>, vector<128x128xbf16>
    %cst_44 = arith.constant dense<0.000000e+00> : vector<16x128xf32>
    %57 = tpu.matmul %55, %56, %cst_44 {dimension_numbers = #tpu.dot_dimension_numbers<[1], [0], [0], [1], [0, 0, 1, 1], [], []>} : vector<16x128xbf16>, vector<128x128xbf16>, vector<16x128xf32> -> vector<16x128xf32>
    %c0_45 = arith.constant 0 : index
    %c0_46 = arith.constant 0 : index
    %58 = vector.load %arg15[%c0_45, %c0_46] : memref<1x128xf32, #tpu.memory_space<vmem>>, vector<1x128xf32>
    %59 = vector.broadcast %58 : vector<1x128xf32> to vector<16x128xf32>
    %60 = arith.addf %57, %59 : vector<16x128xf32>
    %61 = arith.addf %60, %0 : vector<16x128xf32>
    %c0_47 = arith.constant 0 : index
    %c0_48 = arith.constant 0 : index
    %62 = vector.load %arg16[%c0_47, %c0_48] : memref<16x128xf32, #tpu.memory_space<vmem>>, vector<16x128xf32>
    tpu.vector_store %arg16[%c0_47, %c0_48], %61 {strides = array<i32>} : memref<16x128xf32, #tpu.memory_space<vmem>>, vector<16x128xf32>,
    return
  }
}

</mosaic_0001>

<llo_original>
// kernel: tpu_custom_call.1
$region0: #{tpu_custom_call.1}
  #allocation0 [shape = 'u32[]', space=smem, size = 0x4, offset = 0x4, fixed_abs, tag = 'smem constant byte address 0x4 - core index']
  #allocation1 [shape = 'u32[144,128]{1,0:T(1,128)}', space=vmem, size = 0x12000, scoped, tag = 'internal scratch']
  %s0 = inlined_call_operand.vmem [shape: bf16[16,16], index: 0, kind: input, shape index: {}]
  %s1 = inlined_call_operand.vmem [shape: bf16[16,48], index: 1, kind: input, shape index: {}]
  %s2 = inlined_call_operand.vmem [shape: bf16[48,16], index: 2, kind: input, shape index: {}]
  %s3 = inlined_call_operand.vmem [shape: bf16[48,16], index: 3, kind: input, shape index: {}]
  %s4 = inlined_call_operand.vmem [shape: f32[16,128], index: 4, kind: input, shape index: {}]
  %s5 = inlined_call_operand.vmem [shape: f32[48,128], index: 5, kind: input, shape index: {}]
  %s6 = inlined_call_operand.vmem [shape: bf16[128,32], index: 6, kind: input, shape index: {}]
  %s7 = inlined_call_operand.vmem [shape: bf16[128,32], index: 7, kind: input, shape index: {}]
  %s8 = inlined_call_operand.vmem [shape: bf16[128,32], index: 8, kind: input, shape index: {}]
  %s9 = inlined_call_operand.vmem [shape: f32[1,32], index: 9, kind: input, shape index: {}]
  %s10 = inlined_call_operand.vmem [shape: bf16[32,32], index: 10, kind: input, shape index: {}]
  %s11 = inlined_call_operand.vmem [shape: f32[1,32], index: 11, kind: input, shape index: {}]
  %s12 = inlined_call_operand.vmem [shape: bf16[128,32], index: 12, kind: input, shape index: {}]
  %s13 = inlined_call_operand.vmem [shape: f32[1,32], index: 13, kind: input, shape index: {}]
  %s14 = inlined_call_operand.vmem [shape: bf16[128,128], index: 14, kind: input, shape index: {}]
  %s15 = inlined_call_operand.vmem [shape: f32[1,128], index: 15, kind: input, shape index: {}]
  %s16 = inlined_call_operand.hbm [shape: f32[16,128], index: 16, kind: output, shape index: {}]
  %s17 = sld [smem:[#allocation0]]
  $region74: #{tpu_custom_call.1} parent=0
    _
  %s19 = ssub.s32 1, %s17
  %s20 = scalar_select 0, %s19, %s17
  $region1: #{tpu_custom_call.1} parent=0
    #allocation2 [shape = 'u8[8192]{0}', space=vmem, size = 0x2000, scoped, tag = 'output window, operand 0, single buffered']
    #allocation3 [shape = 's32[1]{0}', space=sflag, size = 0x4, scoped, tag = 'scoped memory for tpu_custom_call.1']
    %21 = vsyncpa [#allocation3], 0
    // Predicated region
    $region2: #{tpu_custom_call.1} parent=1 // pred_check
      _
    $region3: #{tpu_custom_call.1} parent=1 // pred_check_branch
      %23 = sbr.rel (0) target = $region5
    $region4: #{tpu_custom_call.1} parent=1 // pred_region
      _
    $region5: #{tpu_custom_call.1} parent=1 // pred_fallthru
      _
    // Predicated region
    $region6: #{tpu_custom_call.1} parent=1 // pred_check
      _
    $region7: #{tpu_custom_call.1} parent=1 // pred_check_branch
      %25 = sbr.rel (0) target = $region9
    $region8: #{tpu_custom_call.1} parent=1 // pred_region
      _
    $region9: #{tpu_custom_call.1} parent=1 // pred_fallthru
      _
    // Predicated region
    $region10: #{tpu_custom_call.1} parent=1 // pred_check
      _
    $region11: #{tpu_custom_call.1} parent=1 // pred_check_branch
      %27 = sbr.rel (0) target = $region13
    $region12: #{tpu_custom_call.1} parent=1 // pred_region
      _
    $region13: #{tpu_custom_call.1} parent=1 // pred_fallthru
      _
    // Predicated region
    $region14: #{tpu_custom_call.1} parent=1 // pred_check
      _
    $region15: #{tpu_custom_call.1} parent=1 // pred_check_branch
      %29 = sbr.rel (0) target = $region17
    $region16: #{tpu_custom_call.1} parent=1 // pred_region
      _
    $region17: #{tpu_custom_call.1} parent=1 // pred_fallthru
      _
    // Predicated region
    $region18: #{tpu_custom_call.1} parent=1 // pred_check
      _
    $region19: #{tpu_custom_call.1} parent=1 // pred_check_branch
      %31 = sbr.rel (0) target = $region21
    $region20: #{tpu_custom_call.1} parent=1 // pred_region
      _
    $region21: #{tpu_custom_call.1} parent=1 // pred_fallthru
      _
    // Predicated region
    $region22: #{tpu_custom_call.1} parent=1 // pred_check
      _
    $region23: #{tpu_custom_call.1} parent=1 // pred_check_branch
      %33 = sbr.rel (0) target = $region25
    $region24: #{tpu_custom_call.1} parent=1 // pred_region
      _
    $region25: #{tpu_custom_call.1} parent=1 // pred_fallthru
      _
    // Predicated region
    $region26: #{tpu_custom_call.1} parent=1 // pred_check
      _
    $region27: #{tpu_custom_call.1} parent=1 // pred_check_branch
      %35 = sbr.rel (0) target = $region29
    $region28: #{tpu_custom_call.1} parent=1 // pred_region
      _
    $region29: #{tpu_custom_call.1} parent=1 // pred_fallthru
      _
    // Predicated region
    $region30: #{tpu_custom_call.1} parent=1 // pred_check
      _
    $region31: #{tpu_custom_call.1} parent=1 // pred_check_branch
      %37 = sbr.rel (0) target = $region33
    $region32: #{tpu_custom_call.1} parent=1 // pred_region
      _
    $region33: #{tpu_custom_call.1} parent=1 // pred_fallthru
      _
    // Predicated region
    $region34: #{tpu_custom_call.1} parent=1 // pred_check
      _
    $region35: #{tpu_custom_call.1} parent=1 // pred_check_branch
      %39 = sbr.rel (0) target = $region37
    $region36: #{tpu_custom_call.1} parent=1 // pred_region
      _
    $region37: #{tpu_custom_call.1} parent=1 // pred_fallthru
      _
    // Predicated region
    $region38: #{tpu_custom_call.1} parent=1 // pred_check
      _
    $region39: #{tpu_custom_call.1} parent=1 // pred_check_branch
      %41 = sbr.rel (0) target = $region41
    $region40: #{tpu_custom_call.1} parent=1 // pred_region
      _
    $region41: #{tpu_custom_call.1} parent=1 // pred_fallthru
      _
    // Predicated region
    $region42: #{tpu_custom_call.1} parent=1 // pred_check
      _
    $region43: #{tpu_custom_call.1} parent=1 // pred_check_branch
      %43 = sbr.rel (0) target = $region45
    $region44: #{tpu_custom_call.1} parent=1 // pred_region
      _
    $region45: #{tpu_custom_call.1} parent=1 // pred_fallthru
      _
    // Predicated region
    $region46: #{tpu_custom_call.1} parent=1 // pred_check
      _
    $region47: #{tpu_custom_call.1} parent=1 // pred_check_branch
      %45 = sbr.rel (0) target = $region49
    $region48: #{tpu_custom_call.1} parent=1 // pred_region
      _
    $region49: #{tpu_custom_call.1} parent=1 // pred_fallthru
      _
    // Predicated region
    $region50: #{tpu_custom_call.1} parent=1 // pred_check
      _
    $region51: #{tpu_custom_call.1} parent=1 // pred_check_branch
      %47 = sbr.rel (0) target = $region53
    $region52: #{tpu_custom_call.1} parent=1 // pred_region
      _
    $region53: #{tpu_custom_call.1} parent=1 // pred_fallthru
      _
    // Predicated region
    $region54: #{tpu_custom_call.1} parent=1 // pred_check
      _
    $region55: #{tpu_custom_call.1} parent=1 // pred_check_branch
      %49 = sbr.rel (0) target = $region57
    $region56: #{tpu_custom_call.1} parent=1 // pred_region
      _
    $region57: #{tpu_custom_call.1} parent=1 // pred_fallthru
      _
    // Predicated region
    $region58: #{tpu_custom_call.1} parent=1 // pred_check
      _
    $region59: #{tpu_custom_call.1} parent=1 // pred_check_branch
      %51 = sbr.rel (0) target = $region61
    $region60: #{tpu_custom_call.1} parent=1 // pred_region
      _
    $region61: #{tpu_custom_call.1} parent=1 // pred_fallthru
      _
    // Predicated region
    $region62: #{tpu_custom_call.1} parent=1 // pred_check
      _
    $region63: #{tpu_custom_call.1} parent=1 // pred_check_branch
      %53 = sbr.rel (0) target = $region65
    $region64: #{tpu_custom_call.1} parent=1 // pred_region
      _
    $region65: #{tpu_custom_call.1} parent=1 // pred_fallthru
      _
    %v55 = vld [vmem:[%s4] sm:$0xff]
    %v56 = vld [vmem:[%s4 + $0x8] sm:$0xff]
    %v57 = vpack.c.bf16 %v56, %v55
    %v58 = vld [vmem:[%s2] sm:$0xf]
    %v59 = vld [vmem:[%s2 + $0x4] sm:$0xf]
    %v60 = vld [vmem:[%s2 + $0x8] sm:$0xf]
    %v61 = vld [vmem:[%s2 + $0xc] sm:$0xf]
    %v62 = vld [vmem:[%s2 + $0x10] sm:$0xf]
    %v63 = vld [vmem:[%s2 + $0x14] sm:$0xf]
    %v70 = vunpack.c.l.b16 %v58
    %v71 = vunpack.c.l.b16 %v59
    %v72 = vunpack.c.l.b16 %v60
    %v73 = vunpack.c.l.b16 %v61
    %v74 = vunpack.c.l.b16 %v62
    %v75 = vunpack.c.l.b16 %v63
    %v76 = vpack.c.b16 %v71, %v70
    %v77 = vpack.c.b16 %v73, %v72
    %v78 = vpack.c.b16 %v75, %v74
    %vm79 = vcmask 130048
    %v81 = vsel %vm79, %v76, 0
    %v84 = vsel %vm79, %v77, 0
    %v87 = vsel %vm79, %v78, 0
    %89 = vmatprep.subr.bf16.mxu0 0
    %90 = vmatpush1.bf16.msra.mxu0 %v57
    %91 = vmatprep.subr.bf16.mxu0 0
    %92 = vmatpush1.bf16.msra.mxu0 0
    %93 = vmatprep.subr.bf16.mxu0 0
    %94 = vmatpush1.bf16.msra.mxu0 0
    %95 = vmatprep.subr.bf16.mxu0 0
    %96 = vmatpush1.bf16.msra.mxu0 0
    %97 = vmatprep.subr.bf16.mxu0 0
    %98 = vmatpush1.bf16.msra.mxu0 0
    %99 = vmatprep.subr.bf16.mxu0 0
    %100 = vmatpush1.bf16.msra.mxu0 0
    %101 = vmatprep.subr.bf16.mxu0 0
    %102 = vmatpush1.bf16.msra.mxu0 0
    %103 = vmatprep.subr.bf16.mxu0 0
    %104 = vmatpush1.bf16.msra.mxu0 0
    %105 = vmatprep.subr.bf16.mxu0 0
    %106 = vmatpush1.bf16.msra.mxu0 0
    %107 = vmatprep.subr.bf16.mxu0 0
    %108 = vmatpush1.bf16.msra.mxu0 0
    %109 = vmatprep.subr.bf16.mxu0 0
    %110 = vmatpush1.bf16.msra.mxu0 0
    %111 = vmatprep.subr.bf16.mxu0 0
    %112 = vmatpush1.bf16.msra.mxu0 0
    %113 = vmatprep.subr.bf16.mxu0 0
    %114 = vmatpush1.bf16.msra.mxu0 0
    %115 = vmatprep.subr.bf16.mxu0 0
    %116 = vmatpush1.bf16.msra.mxu0 0
    %117 = vmatprep.subr.bf16.mxu0 0
    %118 = vmatpush1.bf16.msra.mxu0 0
    %119 = vmatprep.subr.bf16.mxu0 0
    %120 = vmatpush1.bf16.msra.mxu0 0
    %121 = vmatprep.mubr.bf16.mxu0 0
    %122 = vmatmul.mubr.bf16.gmra.mrb[0].mxu0 %v81
    %v123 = vpop.f32.mrb[0].mxu0
    %v124 = vadd.f32 0.0, %v123
    %v125 = vpop.f32.mrb[0].mxu0
    %v126 = vpop.f32.mrb[0].mxu0
    %v127 = vadd.f32 0.0, %v126
    %v128 = vpop.f32.mrb[0].mxu0
    %129 = vmatprep.mubr.bf16.mxu0 0
    %130 = vmatmul.mubr.bf16.gmra.mrb[0].mxu0 %v84
    %v131 = vpop.f32.mrb[0].mxu0
    %v132 = vadd.f32 0.0, %v131
    %v133 = vpop.f32.mrb[0].mxu0
    %v134 = vpop.f32.mrb[0].mxu0
    %v135 = vadd.f32 0.0, %v134
    %v136 = vpop.f32.mrb[0].mxu0
    %137 = vmatprep.mubr.bf16.mxu0 0
    %138 = vmatmul.mubr.bf16.gmra.mrb[0].mxu0 %v87
    %v139 = vpop.f32.mrb[0].mxu0
    %v140 = vadd.f32 0.0, %v139
    %v141 = vpop.f32.mrb[0].mxu0
    %v142 = vpop.f32.mrb[0].mxu0
    %v143 = vadd.f32 0.0, %v142
    %v144 = vpop.f32.mrb[0].mxu0
    %145 = vdwg.mxu0
    %v146 = vld [vmem:[%s3] sm:$0xf]
    %v147 = vld [vmem:[%s3 + $0x4] sm:$0xf]
    %v148 = vld [vmem:[%s3 + $0x8] sm:$0xf]
    %v149 = vld [vmem:[%s3 + $0xc] sm:$0xf]
    %v150 = vld [vmem:[%s3 + $0x10] sm:$0xf]
    %v151 = vld [vmem:[%s3 + $0x14] sm:$0xf]
    %v158 = vunpack.c.l.b16 %v146
    %v159 = vunpack.c.l.b16 %v147
    %v160 = vunpack.c.l.b16 %v148
    %v161 = vunpack.c.l.b16 %v149
    %v162 = vunpack.c.l.b16 %v150
    %v163 = vunpack.c.l.b16 %v151
    %v164 = vpack.c.b16 %v159, %v158
    %v165 = vpack.c.b16 %v161, %v160
    %v166 = vpack.c.b16 %v163, %v162
    %v168 = vsel %vm79, %v164, 0
    %v171 = vsel %vm79, %v165, 0
    %v174 = vsel %vm79, %v166, 0
    %176 = vmatprep.subr.bf16.mxu0 0
    %177 = vmatpush1.bf16.msra.mxu0 %v57
    %178 = vmatprep.subr.bf16.mxu0 0
    %179 = vmatpush1.bf16.msra.mxu0 0
    %180 = vmatprep.subr.bf16.mxu0 0
    %181 = vmatpush1.bf16.msra.mxu0 0
    %182 = vmatprep.subr.bf16.mxu0 0
    %183 = vmatpush1.bf16.msra.mxu0 0
    %184 = vmatprep.subr.bf16.mxu0 0
    %185 = vmatpush1.bf16.msra.mxu0 0
    %186 = vmatprep.subr.bf16.mxu0 0
    %187 = vmatpush1.bf16.msra.mxu0 0
    %188 = vmatprep.subr.bf16.mxu0 0
    %189 = vmatpush1.bf16.msra.mxu0 0
    %190 = vmatprep.subr.bf16.mxu0 0
    %191 = vmatpush1.bf16.msra.mxu0 0
    %192 = vmatprep.subr.bf16.mxu0 0
    %193 = vmatpush1.bf16.msra.mxu0 0
    %194 = vmatprep.subr.bf16.mxu0 0
    %195 = vmatpush1.bf16.msra.mxu0 0
    %196 = vmatprep.subr.bf16.mxu0 0
    %197 = vmatpush1.bf16.msra.mxu0 0
    %198 = vmatprep.subr.bf16.mxu0 0
    %199 = vmatpush1.bf16.msra.mxu0 0
    %200 = vmatprep.subr.bf16.mxu0 0
    %201 = vmatpush1.bf16.msra.mxu0 0
    %202 = vmatprep.subr.bf16.mxu0 0
    %203 = vmatpush1.bf16.msra.mxu0 0
    %204 = vmatprep.subr.bf16.mxu0 0
    %205 = vmatpush1.bf16.msra.mxu0 0
    %206 = vmatprep.subr.bf16.mxu0 0
    %207 = vmatpush1.bf16.msra.mxu0 0
    %208 = vmatprep.mubr.bf16.mxu0 0
    %209 = vmatmul.mubr.bf16.gmra.mrb[0].mxu0 %v168
    %v210 = vpop.f32.mrb[0].mxu0
    %v211 = vadd.f32 0.0, %v210
    %v212 = vpop.f32.mrb[0].mxu0
    %v213 = vpop.f32.mrb[0].mxu0
    %v214 = vadd.f32 0.0, %v213
    %v215 = vpop.f32.mrb[0].mxu0
    %216 = vmatprep.mubr.bf16.mxu0 0
    %217 = vmatmul.mubr.bf16.gmra.mrb[0].mxu0 %v171
    %v218 = vpop.f32.mrb[0].mxu0
    %v219 = vadd.f32 0.0, %v218
    %v220 = vpop.f32.mrb[0].mxu0
    %v221 = vpop.f32.mrb[0].mxu0
    %v222 = vadd.f32 0.0, %v221
    %v223 = vpop.f32.mrb[0].mxu0
    %224 = vmatprep.mubr.bf16.mxu0 0
    %225 = vmatmul.mubr.bf16.gmra.mrb[0].mxu0 %v174
    %v226 = vpop.f32.mrb[0].mxu0
    %v227 = vadd.f32 0.0, %v226
    %v228 = vpop.f32.mrb[0].mxu0
    %v229 = vpop.f32.mrb[0].mxu0
    %v230 = vadd.f32 0.0, %v229
    %v231 = vpop.f32.mrb[0].mxu0
    %232 = vdwg.mxu0
    %v233 = vpack.c.bf16 %v127, %v124
    %v234 = vpack.c.bf16 %v135, %v132
    %v235 = vpack.c.bf16 %v143, %v140
    %v236 = vld [vmem:[%s6] sm:$0xf]
    %v237 = vld [vmem:[%s6 + $0x4] sm:$0xf]
    %v238 = vld [vmem:[%s6 + $0x8] sm:$0xf]
    %v239 = vld [vmem:[%s6 + $0xc] sm:$0xf]
    %v240 = vld [vmem:[%s6 + $0x10] sm:$0xf]
    %v241 = vld [vmem:[%s6 + $0x14] sm:$0xf]
    %v242 = vld [vmem:[%s6 + $0x18] sm:$0xf]
    %v243 = vld [vmem:[%s6 + $0x1c] sm:$0xf]
    %v244 = vld [vmem:[%s6 + $0x20] sm:$0xf]
    %v245 = vld [vmem:[%s6 + $0x24] sm:$0xf]
    %v246 = vld [vmem:[%s6 + $0x28] sm:$0xf]
    %v247 = vld [vmem:[%s6 + $0x2c] sm:$0xf]
    %v248 = vld [vmem:[%s6 + $0x30] sm:$0xf]
    %v249 = vld [vmem:[%s6 + $0x34] sm:$0xf]
    %v250 = vld [vmem:[%s6 + $0x38] sm:$0xf]
    %v251 = vld [vmem:[%s6 + $0x3c] sm:$0xf]
    %v252 = vpack.c.bf16 %v214, %v211
    %v253 = vpack.c.bf16 %v222, %v219
    %v254 = vpack.c.bf16 %v230, %v227
    %v255 = vld [vmem:[%s7] sm:$0xf]
    %v256 = vld [vmem:[%s7 + $0x4] sm:$0xf]
    %v257 = vld [vmem:[%s7 + $0x8] sm:$0xf]
    %v258 = vld [vmem:[%s7 + $0xc] sm:$0xf]
    %v259 = vld [vmem:[%s7 + $0x10] sm:$0xf]
    %v260 = vld [vmem:[%s7 + $0x14] sm:$0xf]
    %v261 = vld [vmem:[%s7 + $0x18] sm:$0xf]
    %v262 = vld [vmem:[%s7 + $0x1c] sm:$0xf]
    %v263 = vld [vmem:[%s7 + $0x20] sm:$0xf]
    %v264 = vld [vmem:[%s7 + $0x24] sm:$0xf]
    %v265 = vld [vmem:[%s7 + $0x28] sm:$0xf]
    %v266 = vld [vmem:[%s7 + $0x2c] sm:$0xf]
    %v267 = vld [vmem:[%s7 + $0x30] sm:$0xf]
    %v268 = vld [vmem:[%s7 + $0x34] sm:$0xf]
    %v269 = vld [vmem:[%s7 + $0x38] sm:$0xf]
    %v270 = vld [vmem:[%s7 + $0x3c] sm:$0xf]
    %v287 = vunpack.c.l.b16 %v255
    %v288 = vunpack.c.l.b16 %v256
    %v289 = vunpack.c.l.b16 %v257
    %v290 = vunpack.c.l.b16 %v258
    %v291 = vunpack.c.l.b16 %v259
    %v292 = vunpack.c.l.b16 %v260
    %v293 = vunpack.c.l.b16 %v261
    %v294 = vunpack.c.l.b16 %v262
    %v295 = vunpack.c.l.b16 %v263
    %v296 = vunpack.c.l.b16 %v264
    %v297 = vunpack.c.l.b16 %v265
    %v298 = vunpack.c.l.b16 %v266
    %v299 = vunpack.c.l.b16 %v267
    %v300 = vunpack.c.l.b16 %v268
    %v301 = vunpack.c.l.b16 %v269
    %v302 = vunpack.c.l.b16 %v270
    %v303 = vpack.c.b16 %v288, %v287
    %v304 = vpack.c.b16 %v290, %v289
    %v305 = vpack.c.b16 %v292, %v291
    %v306 = vpack.c.b16 %v294, %v293
    %v307 = vpack.c.b16 %v296, %v295
    %v308 = vpack.c.b16 %v298, %v297
    %v309 = vpack.c.b16 %v300, %v299
    %v310 = vpack.c.b16 %v302, %v301
    %319 = vmatprep.subr.bf16.mxu0 0
    %320 = vmatpush1.bf16.msra.mxu0 %v303
    %321 = vmatprep.subr.bf16.mxu0 0
    %322 = vmatpush1.bf16.msra.mxu0 %v304
    %323 = vmatprep.subr.bf16.mxu0 0
    %324 = vmatpush1.bf16.msra.mxu0 %v305
    %325 = vmatprep.subr.bf16.mxu0 0
    %326 = vmatpush1.bf16.msra.mxu0 %v306
    %327 = vmatprep.subr.bf16.mxu0 0
    %328 = vmatpush1.bf16.msra.mxu0 %v307
    %329 = vmatprep.subr.bf16.mxu0 0
    %330 = vmatpush1.bf16.msra.mxu0 %v308
    %331 = vmatprep.subr.bf16.mxu0 0
    %332 = vmatpush1.bf16.msra.mxu0 %v309
    %333 = vmatprep.subr.bf16.mxu0 0
    %334 = vmatpush1.bf16.msra.mxu0 %v310
    %335 = vmatprep.subr.bf16.mxu0 0
    %336 = vmatpush1.bf16.msra.mxu0 0
    %337 = vmatprep.subr.bf16.mxu0 0
    %338 = vmatpush1.bf16.msra.mxu0 0
    %339 = vmatprep.subr.bf16.mxu0 0
    %340 = vmatpush1.bf16.msra.mxu0 0
    %341 = vmatprep.subr.bf16.mxu0 0
    %342 = vmatpush1.bf16.msra.mxu0 0
    %343 = vmatprep.subr.bf16.mxu0 0
    %344 = vmatpush1.bf16.msra.mxu0 0
    %345 = vmatprep.subr.bf16.mxu0 0
    %346 = vmatpush1.bf16.msra.mxu0 0
    %347 = vmatprep.subr.bf16.mxu0 0
    %348 = vmatpush1.bf16.msra.mxu0 0
    %349 = vmatprep.subr.bf16.mxu0 0
    %350 = vmatpush1.bf16.msra.mxu0 0
    %351 = vmatprep.mubr.bf16.mxu0 0
    %352 = vmatmul.mubr.bf16.gmra.mrb[0].mxu0 %v252
    %v353 = vpop.f32.mrb[0].mxu0
    %v354 = vadd.f32 0.0, %v353
    %v355 = vpop.f32.mrb[0].mxu0
    %v356 = vpop.f32.mrb[0].mxu0
    %v357 = vadd.f32 0.0, %v356
    %v358 = vpop.f32.mrb[0].mxu0
    %359 = vmatprep.mubr.bf16.mxu0 0
    %360 = vmatmul.mubr.bf16.gmra.mrb[0].mxu0 %v253
    %v361 = vpop.f32.mrb[0].mxu0
    %v362 = vadd.f32 0.0, %v361
    %v363 = vpop.f32.mrb[0].mxu0
    %v364 = vpop.f32.mrb[0].mxu0
    %v365 = vadd.f32 0.0, %v364
    %v366 = vpop.f32.mrb[0].mxu0
    %367 = vmatprep.mubr.bf16.mxu0 0
    %368 = vmatmul.mubr.bf16.gmra.mrb[0].mxu0 %v254
    %v369 = vpop.f32.mrb[0].mxu0
    %v370 = vadd.f32 0.0, %v369
    %v371 = vpop.f32.mrb[0].mxu0
    %v372 = vpop.f32.mrb[0].mxu0
    %v373 = vadd.f32 0.0, %v372
    %v374 = vpop.f32.mrb[0].mxu0
    %375 = vdwg.mxu0
    %v392 = vunpack.c.l.b16 %v236
    %v393 = vunpack.c.l.b16 %v237
    %v394 = vunpack.c.l.b16 %v238
    %v395 = vunpack.c.l.b16 %v239
    %v396 = vunpack.c.l.b16 %v240
    %v397 = vunpack.c.l.b16 %v241
    %v398 = vunpack.c.l.b16 %v242
    %v399 = vunpack.c.l.b16 %v243
    %v400 = vunpack.c.l.b16 %v244
    %v401 = vunpack.c.l.b16 %v245
    %v402 = vunpack.c.l.b16 %v246
    %v403 = vunpack.c.l.b16 %v247
    %v404 = vunpack.c.l.b16 %v248
    %v405 = vunpack.c.l.b16 %v249
    %v406 = vunpack.c.l.b16 %v250
    %v407 = vunpack.c.l.b16 %v251
    %v408 = vpack.c.b16 %v393, %v392
    %v409 = vpack.c.b16 %v395, %v394
    %v410 = vpack.c.b16 %v397, %v396
    %v411 = vpack.c.b16 %v399, %v398
    %v412 = vpack.c.b16 %v401, %v400
    %v413 = vpack.c.b16 %v403, %v402
    %v414 = vpack.c.b16 %v405, %v404
    %v415 = vpack.c.b16 %v407, %v406
    %424 = vmatprep.subr.bf16.mxu0 0
    %425 = vmatpush1.bf16.msra.mxu0 %v408
    %426 = vmatprep.subr.bf16.mxu0 0
    %427 = vmatpush1.bf16.msra.mxu0 %v409
    %428 = vmatprep.subr.bf16.mxu0 0
    %429 = vmatpush1.bf16.msra.mxu0 %v410
    %430 = vmatprep.subr.bf16.mxu0 0
    %431 = vmatpush1.bf16.msra.mxu0 %v411
    %432 = vmatprep.subr.bf16.mxu0 0
    %433 = vmatpush1.bf16.msra.mxu0 %v412
    %434 = vmatprep.subr.bf16.mxu0 0
    %435 = vmatpush1.bf16.msra.mxu0 %v413
    %436 = vmatprep.subr.bf16.mxu0 0
    %437 = vmatpush1.bf16.msra.mxu0 %v414
    %438 = vmatprep.subr.bf16.mxu0 0
    %439 = vmatpush1.bf16.msra.mxu0 %v415
    %440 = vmatprep.subr.bf16.mxu0 0
    %441 = vmatpush1.bf16.msra.mxu0 0
    %442 = vmatprep.subr.bf16.mxu0 0
    %443 = vmatpush1.bf16.msra.mxu0 0
    %444 = vmatprep.subr.bf16.mxu0 0
    %445 = vmatpush1.bf16.msra.mxu0 0
    %446 = vmatprep.subr.bf16.mxu0 0
    %447 = vmatpush1.bf16.msra.mxu0 0
    %448 = vmatprep.subr.bf16.mxu0 0
    %449 = vmatpush1.bf16.msra.mxu0 0
    %450 = vmatprep.subr.bf16.mxu0 0
    %451 = vmatpush1.bf16.msra.mxu0 0
    %452 = vmatprep.subr.bf16.mxu0 0
    %453 = vmatpush1.bf16.msra.mxu0 0
    %454 = vmatprep.subr.bf16.mxu0 0
    %455 = vmatpush1.bf16.msra.mxu0 0
    %456 = vmatprep.mubr.bf16.mxu0 0
    %457 = vmatmul.mubr.bf16.gmra.mrb[0].mxu0 %v233
    %v458 = vpop.f32.mrb[0].mxu0
    %v459 = vadd.f32 %v354, %v458
    %v460 = vpop.f32.mrb[0].mxu0
    %v461 = vpop.f32.mrb[0].mxu0
    %v462 = vadd.f32 %v357, %v461
    %v463 = vpop.f32.mrb[0].mxu0
    %464 = vmatprep.mubr.bf16.mxu0 0
    %465 = vmatmul.mubr.bf16.gmra.mrb[0].mxu0 %v234
    %v466 = vpop.f32.mrb[0].mxu0
    %v467 = vadd.f32 %v362, %v466
    %v468 = vpop.f32.mrb[0].mxu0
    %v469 = vpop.f32.mrb[0].mxu0
    %v470 = vadd.f32 %v365, %v469
    %v471 = vpop.f32.mrb[0].mxu0
    %472 = vmatprep.mubr.bf16.mxu0 0
    %473 = vmatmul.mubr.bf16.gmra.mrb[0].mxu0 %v235
    %v474 = vpop.f32.mrb[0].mxu0
    %v475 = vadd.f32 %v370, %v474
    %v476 = vpop.f32.mrb[0].mxu0
    %v477 = vpop.f32.mrb[0].mxu0
    %v478 = vadd.f32 %v373, %v477
    %v479 = vpop.f32.mrb[0].mxu0
    %480 = vdwg.mxu0
    %v481 = vld [vmem:[%s5] sm:$0xff]
    %v482 = vld [vmem:[%s5 + $0x8] sm:$0xff]
    %v483 = vld [vmem:[%s5 + $0x10] sm:$0xff]
    %v484 = vld [vmem:[%s5 + $0x18] sm:$0xff]
    %v485 = vld [vmem:[%s5 + $0x20] sm:$0xff]
    %v486 = vld [vmem:[%s5 + $0x28] sm:$0xff]
    %v487 = vpack.c.bf16 %v482, %v481
    %v488 = vpack.c.bf16 %v484, %v483
    %v489 = vpack.c.bf16 %v486, %v485
    %v490 = vld [vmem:[%s8] sm:$0xf]
    %v491 = vld [vmem:[%s8 + $0x4] sm:$0xf]
    %v492 = vld [vmem:[%s8 + $0x8] sm:$0xf]
    %v493 = vld [vmem:[%s8 + $0xc] sm:$0xf]
    %v494 = vld [vmem:[%s8 + $0x10] sm:$0xf]
    %v495 = vld [vmem:[%s8 + $0x14] sm:$0xf]
    %v496 = vld [vmem:[%s8 + $0x18] sm:$0xf]
    %v497 = vld [vmem:[%s8 + $0x1c] sm:$0xf]
    %v498 = vld [vmem:[%s8 + $0x20] sm:$0xf]
    %v499 = vld [vmem:[%s8 + $0x24] sm:$0xf]
    %v500 = vld [vmem:[%s8 + $0x28] sm:$0xf]
    %v501 = vld [vmem:[%s8 + $0x2c] sm:$0xf]
    %v502 = vld [vmem:[%s8 + $0x30] sm:$0xf]
    %v503 = vld [vmem:[%s8 + $0x34] sm:$0xf]
    %v504 = vld [vmem:[%s8 + $0x38] sm:$0xf]
    %v505 = vld [vmem:[%s8 + $0x3c] sm:$0xf]
    %v522 = vunpack.c.l.b16 %v490
    %v523 = vunpack.c.l.b16 %v491
    %v524 = vunpack.c.l.b16 %v492
    %v525 = vunpack.c.l.b16 %v493
    %v526 = vunpack.c.l.b16 %v494
    %v527 = vunpack.c.l.b16 %v495
    %v528 = vunpack.c.l.b16 %v496
    %v529 = vunpack.c.l.b16 %v497
    %v530 = vunpack.c.l.b16 %v498
    %v531 = vunpack.c.l.b16 %v499
    %v532 = vunpack.c.l.b16 %v500
    %v533 = vunpack.c.l.b16 %v501
    %v534 = vunpack.c.l.b16 %v502
    %v535 = vunpack.c.l.b16 %v503
    %v536 = vunpack.c.l.b16 %v504
    %v537 = vunpack.c.l.b16 %v505
    %v538 = vpack.c.b16 %v523, %v522
    %v539 = vpack.c.b16 %v525, %v524
    %v540 = vpack.c.b16 %v527, %v526
    %v541 = vpack.c.b16 %v529, %v528
    %v542 = vpack.c.b16 %v531, %v530
    %v543 = vpack.c.b16 %v533, %v532
    %v544 = vpack.c.b16 %v535, %v534
    %v545 = vpack.c.b16 %v537, %v536
    %554 = vmatprep.subr.bf16.mxu0 0
    %555 = vmatpush1.bf16.msra.mxu0 %v538
    %556 = vmatprep.subr.bf16.mxu0 0
    %557 = vmatpush1.bf16.msra.mxu0 %v539
    %558 = vmatprep.subr.bf16.mxu0 0
    %559 = vmatpush1.bf16.msra.mxu0 %v540
    %560 = vmatprep.subr.bf16.mxu0 0
    %561 = vmatpush1.bf16.msra.mxu0 %v541
    %562 = vmatprep.subr.bf16.mxu0 0
    %563 = vmatpush1.bf16.msra.mxu0 %v542
    %564 = vmatprep.subr.bf16.mxu0 0
    %565 = vmatpush1.bf16.msra.mxu0 %v543
    %566 = vmatprep.subr.bf16.mxu0 0
    %567 = vmatpush1.bf16.msra.mxu0 %v544
    %568 = vmatprep.subr.bf16.mxu0 0
    %569 = vmatpush1.bf16.msra.mxu0 %v545
    %570 = vmatprep.subr.bf16.mxu0 0
    %571 = vmatpush1.bf16.msra.mxu0 0
    %572 = vmatprep.subr.bf16.mxu0 0
    %573 = vmatpush1.bf16.msra.mxu0 0
    %574 = vmatprep.subr.bf16.mxu0 0
    %575 = vmatpush1.bf16.msra.mxu0 0
    %576 = vmatprep.subr.bf16.mxu0 0
    %577 = vmatpush1.bf16.msra.mxu0 0
    %578 = vmatprep.subr.bf16.mxu0 0
    %579 = vmatpush1.bf16.msra.mxu0 0
    %580 = vmatprep.subr.bf16.mxu0 0
    %581 = vmatpush1.bf16.msra.mxu0 0
    %582 = vmatprep.subr.bf16.mxu0 0
    %583 = vmatpush1.bf16.msra.mxu0 0
    %584 = vmatprep.subr.bf16.mxu0 0
    %585 = vmatpush1.bf16.msra.mxu0 0
    %586 = vmatprep.mubr.bf16.mxu0 0
    %587 = vmatmul.mubr.bf16.gmra.mrb[0].mxu0 %v487
    %v588 = vpop.f32.mrb[0].mxu0
    %v589 = vadd.f32 0.0, %v588
    %v590 = vpop.f32.mrb[0].mxu0
    %v591 = vpop.f32.mrb[0].mxu0
    %v592 = vadd.f32 0.0, %v591
    %v593 = vpop.f32.mrb[0].mxu0
    %594 = vmatprep.mubr.bf16.mxu0 0
    %595 = vmatmul.mubr.bf16.gmra.mrb[0].mxu0 %v488
    %v596 = vpop.f32.mrb[0].mxu0
    %v597 = vadd.f32 0.0, %v596
    %v598 = vpop.f32.mrb[0].mxu0
    %v599 = vpop.f32.mrb[0].mxu0
    %v600 = vadd.f32 0.0, %v599
    %v601 = vpop.f32.mrb[0].mxu0
    %602 = vmatprep.mubr.bf16.mxu0 0
    %603 = vmatmul.mubr.bf16.gmra.mrb[0].mxu0 %v489
    %v604 = vpop.f32.mrb[0].mxu0
    %v605 = vadd.f32 0.0, %v604
    %v606 = vpop.f32.mrb[0].mxu0
    %v607 = vpop.f32.mrb[0].mxu0
    %v608 = vadd.f32 0.0, %v607
    %v609 = vpop.f32.mrb[0].mxu0
    %610 = vdwg.mxu0
    %v611 = vadd.f32 %v459, %v589
    %v612 = vadd.f32 %v462, %v592
    %v613 = vadd.f32 %v467, %v597
    %v614 = vadd.f32 %v470, %v600
    %v615 = vadd.f32 %v475, %v605
    %v616 = vadd.f32 %v478, %v608
    %v617 = vld [vmem:[%s9] sm:$0x1]
    %v619 = vlaneseq
    %v620 = vshrl.u32 %v619, 7
    %v621 = vsub.s32 0, %v620
    %v622 = vrot.slane %v617, %v621
    %v624 = vadd.f32 %v611, %v622
    %v625 = vadd.f32 %v612, %v622
    %v626 = vadd.f32 %v613, %v622
    %v627 = vadd.f32 %v614, %v622
    %v628 = vadd.f32 %v615, %v622
    %v629 = vadd.f32 %v616, %v622
    %v630 = vmax.f32 %v624, 0.0
    %v631 = vmax.f32 %v625, 0.0
    %v632 = vmax.f32 %v626, 0.0
    %v633 = vmax.f32 %v627, 0.0
    %v634 = vmax.f32 %v628, 0.0
    %v635 = vmax.f32 %v629, 0.0
    %v636 = vpack.c.bf16 %v631, %v630
    %v637 = vpack.c.bf16 %v633, %v632
    %v638 = vpack.c.bf16 %v635, %v634
    %v639 = vld [vmem:[%s10] sm:$0xf]
    %v640 = vld [vmem:[%s10 + $0x4] sm:$0xf]
    %v641 = vld [vmem:[%s10 + $0x8] sm:$0xf]
    %v642 = vld [vmem:[%s10 + $0xc] sm:$0xf]
    %v643 = vld [vmem:[%s11] sm:$0x1]
    %v645 = vlaneseq
    %v646 = vshrl.u32 %v645, 7
    %v647 = vsub.s32 0, %v646
    %v648 = vrot.slane %v643, %v647
    %v654 = vunpack.c.l.b16 %v639
    %v655 = vunpack.c.l.b16 %v640
    %v656 = vunpack.c.l.b16 %v641
    %v657 = vunpack.c.l.b16 %v642
    %v658 = vpack.c.b16 %v655, %v654
    %v659 = vpack.c.b16 %v657, %v656
    %vm662 = vcmask 261120
    %v664 = vsel %vm662, %v636, 0
    %v667 = vsel %vm662, %v637, 0
    %v670 = vsel %vm662, %v638, 0
    %672 = vmatprep.subr.bf16.mxu0 0
    %673 = vmatpush1.bf16.msra.mxu0 %v658
    %674 = vmatprep.subr.bf16.mxu0 0
    %675 = vmatpush1.bf16.msra.mxu0 %v659
    %676 = vmatprep.subr.bf16.mxu0 0
    %677 = vmatpush1.bf16.msra.mxu0 0
    %678 = vmatprep.subr.bf16.mxu0 0
    %679 = vmatpush1.bf16.msra.mxu0 0
    %680 = vmatprep.subr.bf16.mxu0 0
    %681 = vmatpush1.bf16.msra.mxu0 0
    %682 = vmatprep.subr.bf16.mxu0 0
    %683 = vmatpush1.bf16.msra.mxu0 0
    %684 = vmatprep.subr.bf16.mxu0 0
    %685 = vmatpush1.bf16.msra.mxu0 0
    %686 = vmatprep.subr.bf16.mxu0 0
    %687 = vmatpush1.bf16.msra.mxu0 0
    %688 = vmatprep.subr.bf16.mxu0 0
    %689 = vmatpush1.bf16.msra.mxu0 0
    %690 = vmatprep.subr.bf16.mxu0 0
    %691 = vmatpush1.bf16.msra.mxu0 0
    %692 = vmatprep.subr.bf16.mxu0 0
    %693 = vmatpush1.bf16.msra.mxu0 0
    %694 = vmatprep.subr.bf16.mxu0 0
    %695 = vmatpush1.bf16.msra.mxu0 0
    %696 = vmatprep.subr.bf16.mxu0 0
    %697 = vmatpush1.bf16.msra.mxu0 0
    %698 = vmatprep.subr.bf16.mxu0 0
    %699 = vmatpush1.bf16.msra.mxu0 0
    %700 = vmatprep.subr.bf16.mxu0 0
    %701 = vmatpush1.bf16.msra.mxu0 0
    %702 = vmatprep.subr.bf16.mxu0 0
    %703 = vmatpush1.bf16.msra.mxu0 0
    %704 = vmatprep.mubr.bf16.mxu0 0
    %705 = vmatmul.mubr.bf16.gmra.mrb[0].mxu0 %v664
    %v706 = vpop.f32.mrb[0].mxu0
    %v707 = vadd.f32 %v648, %v706
    %v708 = vpop.f32.mrb[0].mxu0
    %v709 = vpop.f32.mrb[0].mxu0
    %v710 = vadd.f32 %v648, %v709
    %v711 = vpop.f32.mrb[0].mxu0
    %712 = vmatprep.mubr.bf16.mxu0 0
    %713 = vmatmul.mubr.bf16.gmra.mrb[0].mxu0 %v667
    %v714 = vpop.f32.mrb[0].mxu0
    %v715 = vadd.f32 %v648, %v714
    %v716 = vpop.f32.mrb[0].mxu0
    %v717 = vpop.f32.mrb[0].mxu0
    %v718 = vadd.f32 %v648, %v717
    %v719 = vpop.f32.mrb[0].mxu0
    %720 = vmatprep.mubr.bf16.mxu0 0
    %721 = vmatmul.mubr.bf16.gmra.mrb[0].mxu0 %v670
    %v722 = vpop.f32.mrb[0].mxu0
    %v723 = vadd.f32 %v648, %v722
    %v724 = vpop.f32.mrb[0].mxu0
    %v725 = vpop.f32.mrb[0].mxu0
    %v726 = vadd.f32 %v648, %v725
    %v727 = vpop.f32.mrb[0].mxu0
    %728 = vdwg.mxu0
    %v729 = vld [vmem:[%s1] sm:$0xf]
    %v730 = vld [vmem:[%s1 + $0x4] sm:$0xf]
    %v731 = vpack.c.bf16 %v710, %v707
    %v732 = vpack.c.bf16 %v718, %v715
    %v733 = vpack.c.bf16 %v726, %v723
    %v736 = vunpack.c.l.b16 %v729
    %v737 = vunpack.c.l.b16 %v730
    %v738 = vpack.c.b16 %v737, %v736
    %vm739 = vcmask 392192
    %v741 = vsel %vm739, %v738, 0
    %743 = vmatprep.subr.bf16.mxu0 0
    %744 = vmatpush1.bf16.msra.mxu0 %v731
    %745 = vmatprep.subr.bf16.mxu0 0
    %746 = vmatpush1.bf16.msra.mxu0 %v732
    %747 = vmatprep.subr.bf16.mxu0 0
    %748 = vmatpush1.bf16.msra.mxu0 %v733
    %749 = vmatprep.subr.bf16.mxu0 0
    %750 = vmatpush1.bf16.msra.mxu0 0
    %751 = vmatprep.subr.bf16.mxu0 0
    %752 = vmatpush1.bf16.msra.mxu0 0
    %753 = vmatprep.subr.bf16.mxu0 0
    %754 = vmatpush1.bf16.msra.mxu0 0
    %755 = vmatprep.subr.bf16.mxu0 0
    %756 = vmatpush1.bf16.msra.mxu0 0
    %757 = vmatprep.subr.bf16.mxu0 0
    %758 = vmatpush1.bf16.msra.mxu0 0
    %759 = vmatprep.subr.bf16.mxu0 0
    %760 = vmatpush1.bf16.msra.mxu0 0
    %761 = vmatprep.subr.bf16.mxu0 0
    %762 = vmatpush1.bf16.msra.mxu0 0
    %763 = vmatprep.subr.bf16.mxu0 0
    %764 = vmatpush1.bf16.msra.mxu0 0
    %765 = vmatprep.subr.bf16.mxu0 0
    %766 = vmatpush1.bf16.msra.mxu0 0
    %767 = vmatprep.subr.bf16.mxu0 0
    %768 = vmatpush1.bf16.msra.mxu0 0
    %769 = vmatprep.subr.bf16.mxu0 0
    %770 = vmatpush1.bf16.msra.mxu0 0
    %771 = vmatprep.subr.bf16.mxu0 0
    %772 = vmatpush1.bf16.msra.mxu0 0
    %773 = vmatprep.subr.bf16.mxu0 0
    %774 = vmatpush1.bf16.msra.mxu0 0
    %775 = vmatprep.mubr.bf16.mxu0 0
    %776 = vmatmul.mubr.bf16.gmra.mrb[0].mxu0 %v741
    %v777 = vpop.f32.mrb[0].mxu0
    %v778 = vadd.f32 0.0, %v777
    %v779 = vpop.f32.mrb[0].mxu0
    %v780 = vpop.f32.mrb[0].mxu0
    %v781 = vadd.f32 0.0, %v780
    %v782 = vpop.f32.mrb[0].mxu0
    %783 = vdwg.mxu0
    %v784 = vld [vmem:[%s0] sm:$0xf]
    %v785 = vld [vmem:[%s0 + $0x4] sm:$0xf]
    %v786 = vpack.c.bf16 %v781, %v778
    %v789 = vunpack.c.l.b16 %v784
    %v790 = vunpack.c.l.b16 %v785
    %v791 = vpack.c.b16 %v790, %v789
    %v793 = vsel %vm79, %v791, 0
    %795 = vmatprep.subr.bf16.mxu0 0
    %796 = vmatpush1.bf16.msra.mxu0 %v786
    %797 = vmatprep.subr.bf16.mxu0 0
    %798 = vmatpush1.bf16.msra.mxu0 0
    %799 = vmatprep.subr.bf16.mxu0 0
    %800 = vmatpush1.bf16.msra.mxu0 0
    %801 = vmatprep.subr.bf16.mxu0 0
    %802 = vmatpush1.bf16.msra.mxu0 0
    %803 = vmatprep.subr.bf16.mxu0 0
    %804 = vmatpush1.bf16.msra.mxu0 0
    %805 = vmatprep.subr.bf16.mxu0 0
    %806 = vmatpush1.bf16.msra.mxu0 0
    %807 = vmatprep.subr.bf16.mxu0 0
    %808 = vmatpush1.bf16.msra.mxu0 0
    %809 = vmatprep.subr.bf16.mxu0 0
    %810 = vmatpush1.bf16.msra.mxu0 0
    %811 = vmatprep.subr.bf16.mxu0 0
    %812 = vmatpush1.bf16.msra.mxu0 0
    %813 = vmatprep.subr.bf16.mxu0 0
    %814 = vmatpush1.bf16.msra.mxu0 0
    %815 = vmatprep.subr.bf16.mxu0 0
    %816 = vmatpush1.bf16.msra.mxu0 0
    %817 = vmatprep.subr.bf16.mxu0 0
    %818 = vmatpush1.bf16.msra.mxu0 0
    %819 = vmatprep.subr.bf16.mxu0 0
    %820 = vmatpush1.bf16.msra.mxu0 0
    %821 = vmatprep.subr.bf16.mxu0 0
    %822 = vmatpush1.bf16.msra.mxu0 0
    %823 = vmatprep.subr.bf16.mxu0 0
    %824 = vmatpush1.bf16.msra.mxu0 0
    %825 = vmatprep.subr.bf16.mxu0 0
    %826 = vmatpush1.bf16.msra.mxu0 0
    %827 = vmatprep.mubr.bf16.mxu0 0
    %828 = vmatmul.mubr.bf16.gmra.mrb[0].mxu0 %v793
    %v829 = vpop.f32.mrb[0].mxu0
    %v830 = vadd.f32 0.0, %v829
    %v831 = vpop.f32.mrb[0].mxu0
    %v832 = vpop.f32.mrb[0].mxu0
    %v833 = vadd.f32 0.0, %v832
    %v834 = vpop.f32.mrb[0].mxu0
    %835 = vdwg.mxu0
    %v836 = vpack.c.bf16 %v833, %v830
    %837 = vmatprep.subr.bf16.mxu0 0
    %838 = vmatpush1.bf16.msra.mxu0 %v836
    %839 = vmatprep.subr.bf16.mxu0 0
    %840 = vmatpush1.bf16.msra.mxu0 0
    %841 = vmatprep.subr.bf16.mxu0 0
    %842 = vmatpush1.bf16.msra.mxu0 0
    %843 = vmatprep.subr.bf16.mxu0 0
    %844 = vmatpush1.bf16.msra.mxu0 0
    %845 = vmatprep.subr.bf16.mxu0 0
    %846 = vmatpush1.bf16.msra.mxu0 0
    %847 = vmatprep.subr.bf16.mxu0 0
    %848 = vmatpush1.bf16.msra.mxu0 0
    %849 = vmatprep.subr.bf16.mxu0 0
    %850 = vmatpush1.bf16.msra.mxu0 0
    %851 = vmatprep.subr.bf16.mxu0 0
    %852 = vmatpush1.bf16.msra.mxu0 0
    %853 = vmatprep.subr.bf16.mxu0 0
    %854 = vmatpush1.bf16.msra.mxu0 0
    %855 = vmatprep.subr.bf16.mxu0 0
    %856 = vmatpush1.bf16.msra.mxu0 0
    %857 = vmatprep.subr.bf16.mxu0 0
    %858 = vmatpush1.bf16.msra.mxu0 0
    %859 = vmatprep.subr.bf16.mxu0 0
    %860 = vmatpush1.bf16.msra.mxu0 0
    %861 = vmatprep.subr.bf16.mxu0 0
    %862 = vmatpush1.bf16.msra.mxu0 0
    %863 = vmatprep.subr.bf16.mxu0 0
    %864 = vmatpush1.bf16.msra.mxu0 0
    %865 = vmatprep.subr.bf16.mxu0 0
    %866 = vmatpush1.bf16.msra.mxu0 0
    %867 = vmatprep.subr.bf16.mxu0 0
    %868 = vmatpush1.bf16.msra.mxu0 0
    %869 = vmatprep.mubr.bf16.mxu0 0
    %870 = vmatmul.mubr.bf16.gmra.mrb[0].mxu0 %v793
    %v871 = vpop.f32.mrb[0].mxu0
    %v872 = vadd.f32 0.0, %v871
    %v873 = vpop.f32.mrb[0].mxu0
    %v874 = vpop.f32.mrb[0].mxu0
    %v875 = vadd.f32 0.0, %v874
    %v876 = vpop.f32.mrb[0].mxu0
    %877 = vdwg.mxu0
    %v878 = vpack.c.bf16 %v875, %v872
    %879 = vmatprep.subr.bf16.mxu0 0
    %880 = vmatpush1.bf16.msra.mxu0 %v878
    %881 = vmatprep.subr.bf16.mxu0 0
    %882 = vmatpush1.bf16.msra.mxu0 0
    %883 = vmatprep.subr.bf16.mxu0 0
    %884 = vmatpush1.bf16.msra.mxu0 0
    %885 = vmatprep.subr.bf16.mxu0 0
    %886 = vmatpush1.bf16.msra.mxu0 0
    %887 = vmatprep.subr.bf16.mxu0 0
    %888 = vmatpush1.bf16.msra.mxu0 0
    %889 = vmatprep.subr.bf16.mxu0 0
    %890 = vmatpush1.bf16.msra.mxu0 0
    %891 = vmatprep.subr.bf16.mxu0 0
    %892 = vmatpush1.bf16.msra.mxu0 0
    %893 = vmatprep.subr.bf16.mxu0 0
    %894 = vmatpush1.bf16.msra.mxu0 0
    %895 = vmatprep.subr.bf16.mxu0 0
    %896 = vmatpush1.bf16.msra.mxu0 0
    %897 = vmatprep.subr.bf16.mxu0 0
    %898 = vmatpush1.bf16.msra.mxu0 0
    %899 = vmatprep.subr.bf16.mxu0 0
    %900 = vmatpush1.bf16.msra.mxu0 0
    %901 = vmatprep.subr.bf16.mxu0 0
    %902 = vmatpush1.bf16.msra.mxu0 0
    %903 = vmatprep.subr.bf16.mxu0 0
    %904 = vmatpush1.bf16.msra.mxu0 0
    %905 = vmatprep.subr.bf16.mxu0 0
    %906 = vmatpush1.bf16.msra.mxu0 0
    %907 = vmatprep.subr.bf16.mxu0 0
    %908 = vmatpush1.bf16.msra.mxu0 0
    %909 = vmatprep.subr.bf16.mxu0 0
    %910 = vmatpush1.bf16.msra.mxu0 0
    %911 = vmatprep.mubr.bf16.mxu0 0
    %912 = vmatmul.mubr.bf16.gmra.mrb[0].mxu0 %v793
    %v913 = vpop.f32.mrb[0].mxu0
    %v914 = vadd.f32 0.0, %v913
    %v915 = vpop.f32.mrb[0].mxu0
    %v916 = vpop.f32.mrb[0].mxu0
    %v917 = vadd.f32 0.0, %v916
    %v918 = vpop.f32.mrb[0].mxu0
    %919 = vdwg.mxu0
    %922 = vrot.lane.b32.xlu0 %v830, 32
    %v923 = vpop.permute.xlu0 %922
    %924 = vrot.lane.b32.xlu0 %v833, 32
    %v925 = vpop.permute.xlu0 %924
    %930 = vrot.lane.b32.xlu0 %v872, 64
    %v931 = vpop.permute.xlu0 %930
    %932 = vrot.lane.b32.xlu0 %v875, 64
    %v933 = vpop.permute.xlu0 %932
    %938 = vrot.lane.b32.xlu0 %v914, 96
    %v939 = vpop.permute.xlu0 %938
    %940 = vrot.lane.b32.xlu0 %v917, 96
    %v941 = vpop.permute.xlu0 %940
    %v944 = vsel %vm662, %v778, %v923
    %v945 = vsel %vm662, %v781, %v925
    %vm946 = vcmask 523264
    %v947 = vsel %vm946, %v944, %v931
    %v948 = vsel %vm946, %v945, %v933
    %vm949 = vcmask 785408
    %v950 = vsel %vm949, %v947, %v939
    %v951 = vsel %vm949, %v948, %v941
    %v952 = vpack.c.bf16 %v951, %v950
    %v953 = vld [vmem:[%s12] sm:$0xf]
    %v954 = vld [vmem:[%s12 + $0x4] sm:$0xf]
    %v955 = vld [vmem:[%s12 + $0x8] sm:$0xf]
    %v956 = vld [vmem:[%s12 + $0xc] sm:$0xf]
    %v957 = vld [vmem:[%s12 + $0x10] sm:$0xf]
    %v958 = vld [vmem:[%s12 + $0x14] sm:$0xf]
    %v959 = vld [vmem:[%s12 + $0x18] sm:$0xf]
    %v960 = vld [vmem:[%s12 + $0x1c] sm:$0xf]
    %v961 = vld [vmem:[%s12 + $0x20] sm:$0xf]
    %v962 = vld [vmem:[%s12 + $0x24] sm:$0xf]
    %v963 = vld [vmem:[%s12 + $0x28] sm:$0xf]
    %v964 = vld [vmem:[%s12 + $0x2c] sm:$0xf]
    %v965 = vld [vmem:[%s12 + $0x30] sm:$0xf]
    %v966 = vld [vmem:[%s12 + $0x34] sm:$0xf]
    %v967 = vld [vmem:[%s12 + $0x38] sm:$0xf]
    %v968 = vld [vmem:[%s12 + $0x3c] sm:$0xf]
    %v969 = vld [vmem:[%s13] sm:$0x1]
    %v971 = vlaneseq
    %v972 = vshrl.u32 %v971, 7
    %v973 = vsub.s32 0, %v972
    %v974 = vrot.slane %v969, %v973
    %v992 = vunpack.c.l.b16 %v953
    %v993 = vunpack.c.l.b16 %v954
    %v994 = vunpack.c.l.b16 %v955
    %v995 = vunpack.c.l.b16 %v956
    %v996 = vunpack.c.l.b16 %v957
    %v997 = vunpack.c.l.b16 %v958
    %v998 = vunpack.c.l.b16 %v959
    %v999 = vunpack.c.l.b16 %v960
    %v1000 = vunpack.c.l.b16 %v961
    %v1001 = vunpack.c.l.b16 %v962
    %v1002 = vunpack.c.l.b16 %v963
    %v1003 = vunpack.c.l.b16 %v964
    %v1004 = vunpack.c.l.b16 %v965
    %v1005 = vunpack.c.l.b16 %v966
    %v1006 = vunpack.c.l.b16 %v967
    %v1007 = vunpack.c.l.b16 %v968
    %v1008 = vpack.c.b16 %v993, %v992
    %v1009 = vpack.c.b16 %v995, %v994
    %v1010 = vpack.c.b16 %v997, %v996
    %v1011 = vpack.c.b16 %v999, %v998
    %v1012 = vpack.c.b16 %v1001, %v1000
    %v1013 = vpack.c.b16 %v1003, %v1002
    %v1014 = vpack.c.b16 %v1005, %v1004
    %v1015 = vpack.c.b16 %v1007, %v1006
    %1024 = vmatprep.subr.bf16.mxu0 0
    %1025 = vmatpush1.bf16.msra.mxu0 %v1008
    %1026 = vmatprep.subr.bf16.mxu0 0
    %1027 = vmatpush1.bf16.msra.mxu0 %v1009
    %1028 = vmatprep.subr.bf16.mxu0 0
    %1029 = vmatpush1.bf16.msra.mxu0 %v1010
    %1030 = vmatprep.subr.bf16.mxu0 0
    %1031 = vmatpush1.bf16.msra.mxu0 %v1011
    %1032 = vmatprep.subr.bf16.mxu0 0
    %1033 = vmatpush1.bf16.msra.mxu0 %v1012
    %1034 = vmatprep.subr.bf16.mxu0 0
    %1035 = vmatpush1.bf16.msra.mxu0 %v1013
    %1036 = vmatprep.subr.bf16.mxu0 0
    %1037 = vmatpush1.bf16.msra.mxu0 %v1014
    %1038 = vmatprep.subr.bf16.mxu0 0
    %1039 = vmatpush1.bf16.msra.mxu0 %v1015
    %1040 = vmatprep.subr.bf16.mxu0 0
    %1041 = vmatpush1.bf16.msra.mxu0 0
    %1042 = vmatprep.subr.bf16.mxu0 0
    %1043 = vmatpush1.bf16.msra.mxu0 0
    %1044 = vmatprep.subr.bf16.mxu0 0
    %1045 = vmatpush1.bf16.msra.mxu0 0
    %1046 = vmatprep.subr.bf16.mxu0 0
    %1047 = vmatpush1.bf16.msra.mxu0 0
    %1048 = vmatprep.subr.bf16.mxu0 0
    %1049 = vmatpush1.bf16.msra.mxu0 0
    %1050 = vmatprep.subr.bf16.mxu0 0
    %1051 = vmatpush1.bf16.msra.mxu0 0
    %1052 = vmatprep.subr.bf16.mxu0 0
    %1053 = vmatpush1.bf16.msra.mxu0 0
    %1054 = vmatprep.subr.bf16.mxu0 0
    %1055 = vmatpush1.bf16.msra.mxu0 0
    %1056 = vmatprep.mubr.bf16.mxu0 0
    %1057 = vmatmul.mubr.bf16.gmra.mrb[0].mxu0 %v952
    %v1058 = vpop.f32.mrb[0].mxu0
    %v1059 = vadd.f32 %v974, %v1058
    %v1060 = vpop.f32.mrb[0].mxu0
    %v1061 = vpop.f32.mrb[0].mxu0
    %v1062 = vadd.f32 %v974, %v1061
    %v1063 = vpop.f32.mrb[0].mxu0
    %1064 = vdwg.mxu0
    %v1065 = vmax.f32 %v1059, 0.0
    %v1066 = vmax.f32 %v1062, 0.0
    %v1067 = vpack.c.bf16 %v1066, %v1065
    %1068 = vmatprep.subr.bf16.mxu0 0
    %1069 = vmatpush1.bf16.msra.mxu0 %v1067
    %1070 = vmatprep.subr.bf16.mxu0 0
    %1071 = vmatpush1.bf16.msra.mxu0 0
    %1072 = vmatprep.subr.bf16.mxu0 0
    %1073 = vmatpush1.bf16.msra.mxu0 0
    %1074 = vmatprep.subr.bf16.mxu0 0
    %1075 = vmatpush1.bf16.msra.mxu0 0
    %1076 = vmatprep.subr.bf16.mxu0 0
    %1077 = vmatpush1.bf16.msra.mxu0 0
    %1078 = vmatprep.subr.bf16.mxu0 0
    %1079 = vmatpush1.bf16.msra.mxu0 0
    %1080 = vmatprep.subr.bf16.mxu0 0
    %1081 = vmatpush1.bf16.msra.mxu0 0
    %1082 = vmatprep.subr.bf16.mxu0 0
    %1083 = vmatpush1.bf16.msra.mxu0 0
    %1084 = vmatprep.subr.bf16.mxu0 0
    %1085 = vmatpush1.bf16.msra.mxu0 0
    %1086 = vmatprep.subr.bf16.mxu0 0
    %1087 = vmatpush1.bf16.msra.mxu0 0
    %1088 = vmatprep.subr.bf16.mxu0 0
    %1089 = vmatpush1.bf16.msra.mxu0 0
    %1090 = vmatprep.subr.bf16.mxu0 0
    %1091 = vmatpush1.bf16.msra.mxu0 0
    %1092 = vmatprep.subr.bf16.mxu0 0
    %1093 = vmatpush1.bf16.msra.mxu0 0
    %1094 = vmatprep.subr.bf16.mxu0 0
    %1095 = vmatpush1.bf16.msra.mxu0 0
    %1096 = vmatprep.subr.bf16.mxu0 0
    %1097 = vmatpush1.bf16.msra.mxu0 0
    %1098 = vmatprep.subr.bf16.mxu0 0
    %1099 = vmatpush1.bf16.msra.mxu0 0
    %1100 = vmatprep.mubr.bf16.mxu0 0
    %1101 = vmatmul.mubr.bf16.gmra.mrb[0].mxu0 %v793
    %v1102 = vpop.f32.mrb[0].mxu0
    %v1103 = vadd.f32 0.0, %v1102
    %v1104 = vpop.f32.mrb[0].mxu0
    %v1105 = vpop.f32.mrb[0].mxu0
    %v1106 = vadd.f32 0.0, %v1105
    %v1107 = vpop.f32.mrb[0].mxu0
    %1108 = vdwg.mxu0
    %v1109 = vpack.c.bf16 %v1106, %v1103
    %1110 = vmatprep.subr.bf16.mxu0 0
    %1111 = vmatpush1.bf16.msra.mxu0 %v1109
    %1112 = vmatprep.subr.bf16.mxu0 0
    %1113 = vmatpush1.bf16.msra.mxu0 0
    %1114 = vmatprep.subr.bf16.mxu0 0
    %1115 = vmatpush1.bf16.msra.mxu0 0
    %1116 = vmatprep.subr.bf16.mxu0 0
    %1117 = vmatpush1.bf16.msra.mxu0 0
    %1118 = vmatprep.subr.bf16.mxu0 0
    %1119 = vmatpush1.bf16.msra.mxu0 0
    %1120 = vmatprep.subr.bf16.mxu0 0
    %1121 = vmatpush1.bf16.msra.mxu0 0
    %1122 = vmatprep.subr.bf16.mxu0 0
    %1123 = vmatpush1.bf16.msra.mxu0 0
    %1124 = vmatprep.subr.bf16.mxu0 0
    %1125 = vmatpush1.bf16.msra.mxu0 0
    %1126 = vmatprep.subr.bf16.mxu0 0
    %1127 = vmatpush1.bf16.msra.mxu0 0
    %1128 = vmatprep.subr.bf16.mxu0 0
    %1129 = vmatpush1.bf16.msra.mxu0 0
    %1130 = vmatprep.subr.bf16.mxu0 0
    %1131 = vmatpush1.bf16.msra.mxu0 0
    %1132 = vmatprep.subr.bf16.mxu0 0
    %1133 = vmatpush1.bf16.msra.mxu0 0
    %1134 = vmatprep.subr.bf16.mxu0 0
    %1135 = vmatpush1.bf16.msra.mxu0 0
    %1136 = vmatprep.subr.bf16.mxu0 0
    %1137 = vmatpush1.bf16.msra.mxu0 0
    %1138 = vmatprep.subr.bf16.mxu0 0
    %1139 = vmatpush1.bf16.msra.mxu0 0
    %1140 = vmatprep.subr.bf16.mxu0 0
    %1141 = vmatpush1.bf16.msra.mxu0 0
    %1142 = vmatprep.mubr.bf16.mxu0 0
    %1143 = vmatmul.mubr.bf16.gmra.mrb[0].mxu0 %v793
    %v1144 = vpop.f32.mrb[0].mxu0
    %v1145 = vadd.f32 0.0, %v1144
    %v1146 = vpop.f32.mrb[0].mxu0
    %v1147 = vpop.f32.mrb[0].mxu0
    %v1148 = vadd.f32 0.0, %v1147
    %v1149 = vpop.f32.mrb[0].mxu0
    %1150 = vdwg.mxu0
    %v1151 = vpack.c.bf16 %v1148, %v1145
    %1152 = vmatprep.subr.bf16.mxu0 0
    %1153 = vmatpush1.bf16.msra.mxu0 %v1151
    %1154 = vmatprep.subr.bf16.mxu0 0
    %1155 = vmatpush1.bf16.msra.mxu0 0
    %1156 = vmatprep.subr.bf16.mxu0 0
    %1157 = vmatpush1.bf16.msra.mxu0 0
    %1158 = vmatprep.subr.bf16.mxu0 0
    %1159 = vmatpush1.bf16.msra.mxu0 0
    %1160 = vmatprep.subr.bf16.mxu0 0
    %1161 = vmatpush1.bf16.msra.mxu0 0
    %1162 = vmatprep.subr.bf16.mxu0 0
    %1163 = vmatpush1.bf16.msra.mxu0 0
    %1164 = vmatprep.subr.bf16.mxu0 0
    %1165 = vmatpush1.bf16.msra.mxu0 0
    %1166 = vmatprep.subr.bf16.mxu0 0
    %1167 = vmatpush1.bf16.msra.mxu0 0
    %1168 = vmatprep.subr.bf16.mxu0 0
    %1169 = vmatpush1.bf16.msra.mxu0 0
    %1170 = vmatprep.subr.bf16.mxu0 0
    %1171 = vmatpush1.bf16.msra.mxu0 0
    %1172 = vmatprep.subr.bf16.mxu0 0
    %1173 = vmatpush1.bf16.msra.mxu0 0
    %1174 = vmatprep.subr.bf16.mxu0 0
    %1175 = vmatpush1.bf16.msra.mxu0 0
    %1176 = vmatprep.subr.bf16.mxu0 0
    %1177 = vmatpush1.bf16.msra.mxu0 0
    %1178 = vmatprep.subr.bf16.mxu0 0
    %1179 = vmatpush1.bf16.msra.mxu0 0
    %1180 = vmatprep.subr.bf16.mxu0 0
    %1181 = vmatpush1.bf16.msra.mxu0 0
    %1182 = vmatprep.subr.bf16.mxu0 0
    %1183 = vmatpush1.bf16.msra.mxu0 0
    %1184 = vmatprep.mubr.bf16.mxu0 0
    %1185 = vmatmul.mubr.bf16.gmra.mrb[0].mxu0 %v793
    %v1186 = vpop.f32.mrb[0].mxu0
    %v1187 = vadd.f32 0.0, %v1186
    %v1188 = vpop.f32.mrb[0].mxu0
    %v1189 = vpop.f32.mrb[0].mxu0
    %v1190 = vadd.f32 0.0, %v1189
    %v1191 = vpop.f32.mrb[0].mxu0
    %1192 = vdwg.mxu0
    %1195 = vrot.lane.b32.xlu0 %v1103, 32
    %v1196 = vpop.permute.xlu0 %1195
    %1197 = vrot.lane.b32.xlu0 %v1106, 32
    %v1198 = vpop.permute.xlu0 %1197
    %1203 = vrot.lane.b32.xlu0 %v1145, 64
    %v1204 = vpop.permute.xlu0 %1203
    %1205 = vrot.lane.b32.xlu0 %v1148, 64
    %v1206 = vpop.permute.xlu0 %1205
    %1211 = vrot.lane.b32.xlu0 %v1187, 96
    %v1212 = vpop.permute.xlu0 %1211
    %1213 = vrot.lane.b32.xlu0 %v1190, 96
    %v1214 = vpop.permute.xlu0 %1213
    %v1217 = vsel %vm662, %v1065, %v1196
    %v1218 = vsel %vm662, %v1066, %v1198
    %v1219 = vsel %vm946, %v1217, %v1204
    %v1220 = vsel %vm946, %v1218, %v1206
    %v1221 = vsel %vm949, %v1219, %v1212
    %v1222 = vsel %vm949, %v1220, %v1214
    %v1223 = vpack.c.bf16 %v1222, %v1221
    %v1224 = vld [vmem:[%s14] sm:$0xf]
    %v1225 = vld [vmem:[%s14 + $0x4] sm:$0xf]
    %v1226 = vld [vmem:[%s14 + $0x8] sm:$0xf]
    %v1227 = vld [vmem:[%s14 + $0xc] sm:$0xf]
    %v1228 = vld [vmem:[%s14 + $0x10] sm:$0xf]
    %v1229 = vld [vmem:[%s14 + $0x14] sm:$0xf]
    %v1230 = vld [vmem:[%s14 + $0x18] sm:$0xf]
    %v1231 = vld [vmem:[%s14 + $0x1c] sm:$0xf]
    %v1232 = vld [vmem:[%s14 + $0x20] sm:$0xf]
    %v1233 = vld [vmem:[%s14 + $0x24] sm:$0xf]
    %v1234 = vld [vmem:[%s14 + $0x28] sm:$0xf]
    %v1235 = vld [vmem:[%s14 + $0x2c] sm:$0xf]
    %v1236 = vld [vmem:[%s14 + $0x30] sm:$0xf]
    %v1237 = vld [vmem:[%s14 + $0x34] sm:$0xf]
    %v1238 = vld [vmem:[%s14 + $0x38] sm:$0xf]
    %v1239 = vld [vmem:[%s14 + $0x3c] sm:$0xf]
    %v1240 = vld [vmem:[%s15] sm:$0x1]
    %v1242 = vlaneseq
    %v1243 = vshrl.u32 %v1242, 7
    %v1244 = vsub.s32 0, %v1243
    %v1245 = vrot.slane %v1240, %v1244
    %v1263 = vunpack.c.l.b16 %v1224
    %v1264 = vunpack.c.l.b16 %v1225
    %v1265 = vunpack.c.l.b16 %v1226
    %v1266 = vunpack.c.l.b16 %v1227
    %v1267 = vunpack.c.l.b16 %v1228
    %v1268 = vunpack.c.l.b16 %v1229
    %v1269 = vunpack.c.l.b16 %v1230
    %v1270 = vunpack.c.l.b16 %v1231
    %v1271 = vunpack.c.l.b16 %v1232
    %v1272 = vunpack.c.l.b16 %v1233
    %v1273 = vunpack.c.l.b16 %v1234
    %v1274 = vunpack.c.l.b16 %v1235
    %v1275 = vunpack.c.l.b16 %v1236
    %v1276 = vunpack.c.l.b16 %v1237
    %v1277 = vunpack.c.l.b16 %v1238
    %v1278 = vunpack.c.l.b16 %v1239
    %v1279 = vpack.c.b16 %v1264, %v1263
    %v1280 = vpack.c.b16 %v1266, %v1265
    %v1281 = vpack.c.b16 %v1268, %v1267
    %v1282 = vpack.c.b16 %v1270, %v1269
    %v1283 = vpack.c.b16 %v1272, %v1271
    %v1284 = vpack.c.b16 %v1274, %v1273
    %v1285 = vpack.c.b16 %v1276, %v1275
    %v1286 = vpack.c.b16 %v1278, %v1277
    %1295 = vmatprep.subr.bf16.mxu0 0
    %1296 = vmatpush1.bf16.msra.mxu0 %v1279
    %1297 = vmatprep.subr.bf16.mxu0 0
    %1298 = vmatpush1.bf16.msra.mxu0 %v1280
    %1299 = vmatprep.subr.bf16.mxu0 0
    %1300 = vmatpush1.bf16.msra.mxu0 %v1281
    %1301 = vmatprep.subr.bf16.mxu0 0
    %1302 = vmatpush1.bf16.msra.mxu0 %v1282
    %1303 = vmatprep.subr.bf16.mxu0 0
    %1304 = vmatpush1.bf16.msra.mxu0 %v1283
    %1305 = vmatprep.subr.bf16.mxu0 0
    %1306 = vmatpush1.bf16.msra.mxu0 %v1284
    %1307 = vmatprep.subr.bf16.mxu0 0
    %1308 = vmatpush1.bf16.msra.mxu0 %v1285
    %1309 = vmatprep.subr.bf16.mxu0 0
    %1310 = vmatpush1.bf16.msra.mxu0 %v1286
    %1311 = vmatprep.subr.bf16.mxu0 0
    %1312 = vmatpush1.bf16.msra.mxu0 0
    %1313 = vmatprep.subr.bf16.mxu0 0
    %1314 = vmatpush1.bf16.msra.mxu0 0
    %1315 = vmatprep.subr.bf16.mxu0 0
    %1316 = vmatpush1.bf16.msra.mxu0 0
    %1317 = vmatprep.subr.bf16.mxu0 0
    %1318 = vmatpush1.bf16.msra.mxu0 0
    %1319 = vmatprep.subr.bf16.mxu0 0
    %1320 = vmatpush1.bf16.msra.mxu0 0
    %1321 = vmatprep.subr.bf16.mxu0 0
    %1322 = vmatpush1.bf16.msra.mxu0 0
    %1323 = vmatprep.subr.bf16.mxu0 0
    %1324 = vmatpush1.bf16.msra.mxu0 0
    %1325 = vmatprep.subr.bf16.mxu0 0
    %1326 = vmatpush1.bf16.msra.mxu0 0
    %1327 = vmatprep.mubr.bf16.mxu0 0
    %1328 = vmatmul.mubr.bf16.gmra.mrb[0].mxu0 %v1223
    %v1329 = vpop.f32.mrb[0].mxu0
    %v1330 = vadd.f32 %v1245, %v1329
    %v1331 = vpop.f32.mrb[0].mxu0
    %v1332 = vpop.f32.mrb[0].mxu0
    %v1333 = vadd.f32 %v1245, %v1332
    %v1334 = vpop.f32.mrb[0].mxu0
    %1335 = vdwg.mxu0
    %v1336 = vadd.f32 %v1330, %v55
    %v1337 = vadd.f32 %v1333, %v56
    %1338 = vst [vmem:[#allocation2] sm:$0xff] %v1336
    %1339 = vst [vmem:[#allocation2 + $0x8] sm:$0xff] %v1337
    // Predicated region
    $region66: #{tpu_custom_call.1} parent=1 // pred_check
      _
    $region67: #{tpu_custom_call.1} parent=1 // pred_check_branch
      %1341 = sbr.rel (0) target = $region69
    $region68: #{tpu_custom_call.1} parent=1 // pred_region
      %s1343 = ssub.s32 256, 256
      %1344 = vsyncadd [#allocation3], %s1343
      %s1345 = sshll.u32 [#allocation2], 4
      %s1346 = int_to_ptr.vmem [resolvable:$true] %s1345
      %1351 = dma.vmem_to_hbm [thread:$0]  %s1346, 256, %s16, [#allocation3], 128, 128, 8
    $region69: #{tpu_custom_call.1} parent=1 // pred_fallthru
      _
    // Predicated region
    $region70: #{tpu_custom_call.1} parent=1 // pred_check
      _
    $region71: #{tpu_custom_call.1} parent=1 // pred_check_branch
      %1353 = sbr.rel (0) target = $region73
    $region72: #{tpu_custom_call.1} parent=1 // pred_region
      %1354 = dma.done [#allocation3], 256
    $region73: #{tpu_custom_call.1} parent=1 // pred_fallthru
      _
    %1355 = vsyncpa [#allocation3], 1

</llo_original>
